<compile_context>
chip_gen: v6e
topology: v6e:2x2x1
jax: 0.10.0
libtpu: 0.0.40
codegen_flags: <defaults>
</compile_context>

<pallas_src>
import functools

import jax
import jax.numpy as jnp
from jax.experimental import pallas as pl
from jax.experimental.pallas import tpu as pltpu


# ---------------------------------------------------------------------------
# Fused kernel: QKV proj + batched-head attention + out proj + residual + LN1
#               + FFN (Linear/ReLU/Linear) + residual + LN2
# One grid step per block of `block_b` batch elements.
# ---------------------------------------------------------------------------
def _encoder_block_kernel(x_ref, wqkv_ref, bqkv_ref, wo_ref, bo_ref,
                          g1_ref, bt1_ref, w1_ref, b1_ref, w2_ref, b2_ref,
                          g2_ref, bt2_ref, out_ref, *, nhead, head_dim, eps):
    blk_b, S, E = x_ref.shape
    R = blk_b * S
    inv_e = 1.0 / E

    # Residuals / LN in f32, matmul inputs in bf16 (weights already bf16).
    x = x_ref[...].reshape(R, E).astype(jnp.float32)          # (R, E)
    xb = x.astype(jnp.bfloat16)

    # --- QKV projection (batch folded into M) ------------------------------
    qkv = jnp.dot(xb, wqkv_ref[...],
                  preferred_element_type=jnp.float32) + bqkv_ref[...]  # (R,3E)

    # --- heads -> leading batch axis (major-dim ops only) ------------------
    def head_batch(t):  # (R, E) -> (nhead*blk_b, S, head_dim)
        parts = [t[:, h * head_dim:(h + 1) * head_dim].reshape(blk_b, S, head_dim)
                 for h in range(nhead)]
        return jnp.concatenate(parts, axis=0)

    qg = head_batch(qkv[:, :E])            # softmax scale folded into Wq/bq
    kg = head_batch(qkv[:, E:2 * E])
    vg = head_batch(qkv[:, 2 * E:])

    # --- one batched dot_general for scores, one for context ---------------
    s = jnp.einsum("gqd,gkd->gqk", qg, kg,
                   preferred_element_type=jnp.float32)         # (G, S, S)
    s = s - jnp.max(s, axis=-1, keepdims=True)
    p = jnp.exp(s)
    p = p * pl.reciprocal(jnp.sum(p, axis=-1, keepdims=True), approx=True)
    ctx_g = jnp.einsum("gqk,gkd->gqd", p, vg,
                       preferred_element_type=jnp.float32)     # (G, S, hd)

    # back to (R, E): per-head major slices + lane concat
    ctx = jnp.concatenate(
        [ctx_g[h * blk_b:(h + 1) * blk_b].reshape(R, head_dim)
         for h in range(nhead)], axis=-1)

    # --- output projection + residual + LayerNorm1 (one-pass stats) --------
    attn = jnp.dot(ctx.astype(jnp.bfloat16), wo_ref[...],
                   preferred_element_type=jnp.float32) + bo_ref[...]
    res1 = attn + x
    mu1 = jnp.sum(res1, axis=-1, keepdims=True) * inv_e
    ms1 = jnp.sum(res1 * res1, axis=-1, keepdims=True) * inv_e
    out2 = (res1 - mu1) * jax.lax.rsqrt(ms1 - mu1 * mu1 + eps)
    out2 = out2 * g1_ref[...] + bt1_ref[...]

    # --- FFN + residual + LayerNorm2 ----------------------------------------
    h = jnp.dot(out2.astype(jnp.bfloat16), w1_ref[...],
                preferred_element_type=jnp.float32) + b1_ref[...]
    h = jnp.maximum(h, 0.0)
    o = jnp.dot(h.astype(jnp.bfloat16), w2_ref[...],
                preferred_element_type=jnp.float32) + b2_ref[...]
    res2 = o + out2
    mu2 = jnp.sum(res2, axis=-1, keepdims=True) * inv_e
    ms2 = jnp.sum(res2 * res2, axis=-1, keepdims=True) * inv_e
    y = (res2 - mu2) * jax.lax.rsqrt(ms2 - mu2 * mu2 + eps)
    y = y * g2_ref[...] + bt2_ref[...]

    out_ref[...] = y.reshape(blk_b, S, E).astype(out_ref.dtype)


# ---------------------------------------------------------------------------
# Parameter preparation (one-time): QKV fusion, softmax-scale folding, bf16.
# ---------------------------------------------------------------------------
def init_params(key, emb_dim, dim_feedforward, nhead,
                *, matmul_dtype=jnp.bfloat16):
    E, F = emb_dim, dim_feedforward
    ks = jax.random.split(key, 10)
    f32 = jnp.float32
    s_e = 1.0 / (E ** 0.5)
    s_f = 1.0 / (F ** 0.5)
    scale = 1.0 / ((E // nhead) ** 0.5)          # softmax scale, folded into q

    wq = jax.random.normal(ks[0], (E, E), f32) * s_e * scale
    wk = jax.random.normal(ks[1], (E, E), f32) * s_e
    wv = jax.random.normal(ks[2], (E, E), f32) * s_e
    wo = jax.random.normal(ks[3], (E, E), f32) * s_e
    w1 = jax.random.normal(ks[4], (E, F), f32) * s_e
    w2 = jax.random.normal(ks[5], (F, E), f32) * s_f
    bqkv = jax.random.normal(ks[6], (1, 3 * E), f32) * 0.05
    bqkv = bqkv.at[:, :E].multiply(scale)        # q-bias gets the scale too

    return dict(
        wqkv=jnp.concatenate([wq, wk, wv], axis=1).astype(matmul_dtype),
        bqkv=bqkv,
        wo=wo.astype(matmul_dtype),
        bo=jax.random.normal(ks[7], (1, E), f32) * 0.05,
        w1=w1.astype(matmul_dtype),
        b1=jax.random.normal(ks[8], (1, F), f32) * 0.05,
        w2=w2.astype(matmul_dtype),
        b2=jax.random.normal(ks[9], (1, E), f32) * 0.05,
        ln1_g=jnp.ones((1, E), f32) * 1.05,
        ln1_b=jnp.ones((1, E), f32) * 0.02,
        ln2_g=jnp.ones((1, E), f32) * 0.95,
        ln2_b=jnp.ones((1, E), f32) * -0.01,
    )


def _pick_block_b(B, S, target_rows):
    """Batch-block size: target large row slabs for the MXU, keep >= 2
    parallel grid steps when possible (v7x has 2 TensorCores), and always
    divide B so no padded batch rows flow through softmax."""
    bb = max(1, min(B, target_rows // max(S, 1)))
    while B % bb:
        bb -= 1
    if B // bb < 2 and B >= 2:
        bb = max(1, B // 2)
        while B % bb:
            bb -= 1
    return bb


# ---------------------------------------------------------------------------
# Wrapper
# ---------------------------------------------------------------------------
def encoder_block(x, params, *, nhead, eps=1e-5, target_rows=512):
    B, S, E = x.shape
    dff = params["w1"].shape[1]
    head_dim = E // nhead
    bb = _pick_block_b(B, S, target_rows)
    grid = (B // bb,)

    def wspec(shape):
        return pl.BlockSpec(shape, lambda b: (0, 0))   # VMEM-resident weights

    cost = pl.CostEstimate(
        flops=(2 * B * S * E * 3 * E          # QKV projection
               + 4 * B * nhead * S * S * head_dim   # scores + context
               + 2 * B * S * E * E            # output projection
               + 4 * B * S * E * dff),         # FFN
        transcendentals=B * nhead * S * S + B * nhead * S + 2 * B * S,
        bytes_accessed=(4 * 2 * B * S * E
                        + 2 * (3 * E * E + E * E + 2 * E * dff)
                        + 4 * (3 * E + dff + 10 * E)),
    )

    kernel = functools.partial(_encoder_block_kernel, nhead=nhead,
                               head_dim=head_dim, eps=eps)
    return pl.pallas_call(
        kernel,
        out_shape=jax.ShapeDtypeStruct((B, S, E), x.dtype),
        grid=grid,
        in_specs=[
            pl.BlockSpec((bb, S, E), lambda b: (b, 0, 0)),   # x
            wspec((E, 3 * E)), wspec((1, 3 * E)),            # wqkv, bqkv
            wspec((E, E)), wspec((1, E)),                    # wo, bo
            wspec((1, E)), wspec((1, E)),                    # ln1 gamma, beta
            wspec((E, dff)), wspec((1, dff)),                # w1, b1
            wspec((dff, E)), wspec((1, E)),                  # w2, b2
            wspec((1, E)), wspec((1, E)),                    # ln2 gamma, beta
        ],
        out_specs=pl.BlockSpec((bb, S, E), lambda b: (b, 0, 0)),
        compiler_params=pltpu.CompilerParams(
            dimension_semantics=("parallel",),
            vmem_limit_bytes=48 * 1024 * 1024),
        cost_estimate=cost,
    )(x, params["wqkv"], params["bqkv"], params["wo"], params["bo"],
      params["ln1_g"], params["ln1_b"], params["w1"], params["b1"],
      params["w2"], params["b2"], params["ln2_g"], params["ln2_b"])


# ---------------------------------------------------------------------------
# Pure-JAX reference (PyTorch eval-mode semantics, same bf16 matmul precision
# and pre-scaled q weights as the kernel).
# ---------------------------------------------------------------------------
def encoder_block_ref(x, params, *, nhead, eps=1e-5):
    B, S, E = x.shape
    dh = E // nhead
    f32, bf16 = jnp.float32, jnp.bfloat16

    def mm(a, w):
        return jnp.dot(a.astype(bf16), w, preferred_element_type=f32)

    def ln(t, g, b):
        mu = t.mean(-1, keepdims=True)
        var = ((t - mu) ** 2).mean(-1, keepdims=True)
        return (t - mu) * jax.lax.rsqrt(var + eps) * g + b

    x2d = x.astype(f32).reshape(B * S, E)
    qkv = mm(x2d, params["wqkv"]) + params["bqkv"]
    q, k, v = jnp.split(qkv, 3, axis=-1)

    def heads(t):
        return t.reshape(B, S, nhead, dh).transpose(0, 2, 1, 3)

    q, k, v = heads(q), heads(k), heads(v)
    s = jnp.einsum("bhsd,bhtd->bhst", q, k)        # scale already folded in
    p = jax.nn.softmax(s, axis=-1)
    ctx = jnp.einsum("bhst,bhtd->bhsd", p, v).transpose(0, 2, 1, 3)
    ctx = ctx.reshape(B * S, E)
    attn = mm(ctx, params["wo"]) + params["bo"]
    out2 = ln(attn + x2d, params["ln1_g"], params["ln1_b"])
    h = jnp.maximum(mm(out2, params["w1"]) + params["b1"], 0.0)
    out3 = mm(h, params["w2"]) + params["b2"]
    y = ln(out3 + out2, params["ln2_g"], params["ln2_b"])
    return y.reshape(B, S, E)


if __name__ == "__main__":
    batch, seq_len, emb_dim = 2, 8, 32
    nhead, dim_feedforward = 8, 64

    key = jax.random.PRNGKey(0)
    kx, kp = jax.random.split(key)
    x = jax.random.normal(kx, (batch, seq_len, emb_dim), dtype=jnp.float32)
    params = init_params(kp, emb_dim, dim_feedforward, nhead)

    out = jax.block_until_ready(encoder_block(x, params, nhead=nhead))
    ref = encoder_block_ref(x, params, nhead=nhead)

    assert out.shape == (batch, seq_len, emb_dim), out.shape
    max_err = float(jnp.max(jnp.abs(out - ref)))
    assert jnp.allclose(out, ref, atol=2e-2, rtol=2e-2), (
        f"mismatch vs reference, max abs err = {max_err}")

    print("KERNEL_OK")
</pallas_src>

<mosaic_0001>
module attributes {stable_mosaic.version = 11 : i64} {
  func.func @_encoder_block_kernel(%arg0: i32, %arg1: memref<1x8x32xf32, #tpu.memory_space<vmem>>, %arg2: memref<32x96xbf16, #tpu.memory_space<vmem>>, %arg3: memref<1x96xf32, #tpu.memory_space<vmem>>, %arg4: memref<32x32xbf16, #tpu.memory_space<vmem>>, %arg5: memref<1x32xf32, #tpu.memory_space<vmem>>, %arg6: memref<1x32xf32, #tpu.memory_space<vmem>>, %arg7: memref<1x32xf32, #tpu.memory_space<vmem>>, %arg8: memref<32x64xbf16, #tpu.memory_space<vmem>>, %arg9: memref<1x64xf32, #tpu.memory_space<vmem>>, %arg10: memref<64x32xbf16, #tpu.memory_space<vmem>>, %arg11: memref<1x32xf32, #tpu.memory_space<vmem>>, %arg12: memref<1x32xf32, #tpu.memory_space<vmem>>, %arg13: memref<1x32xf32, #tpu.memory_space<vmem>>, %arg14: memref<1x8x32xf32, #tpu.memory_space<vmem>>) attributes {dimension_semantics = [#tpu.dimension_semantics<parallel>], iteration_bounds = array<i64: 2>, scalar_prefetch = 0 : i64, scratch_operands = 0 : i64, tpu.core_type = #tpu.core_type<tc>, window_params = [{transform_indices = @transform_0, window_bounds = array<i64: 1, 8, 32>}, {pipeline_mode = #tpu.pipeline_mode<synchronous>, transform_indices = @transform_1, window_bounds = array<i64: 32, 96>}, {pipeline_mode = #tpu.pipeline_mode<synchronous>, transform_indices = @transform_2, window_bounds = array<i64: 1, 96>}, {pipeline_mode = #tpu.pipeline_mode<synchronous>, transform_indices = @transform_3, window_bounds = array<i64: 32, 32>}, {pipeline_mode = #tpu.pipeline_mode<synchronous>, transform_indices = @transform_4, window_bounds = array<i64: 1, 32>}, {pipeline_mode = #tpu.pipeline_mode<synchronous>, transform_indices = @transform_5, window_bounds = array<i64: 1, 32>}, {pipeline_mode = #tpu.pipeline_mode<synchronous>, transform_indices = @transform_6, window_bounds = array<i64: 1, 32>}, {pipeline_mode = #tpu.pipeline_mode<synchronous>, transform_indices = @transform_7, window_bounds = array<i64: 32, 64>}, {pipeline_mode = #tpu.pipeline_mode<synchronous>, transform_indices = @transform_8, window_bounds = array<i64: 1, 64>}, {pipeline_mode = #tpu.pipeline_mode<synchronous>, transform_indices = @transform_9, window_bounds = array<i64: 64, 32>}, {pipeline_mode = #tpu.pipeline_mode<synchronous>, transform_indices = @transform_10, window_bounds = array<i64: 1, 32>}, {pipeline_mode = #tpu.pipeline_mode<synchronous>, transform_indices = @transform_11, window_bounds = array<i64: 1, 32>}, {pipeline_mode = #tpu.pipeline_mode<synchronous>, transform_indices = @transform_12, window_bounds = array<i64: 1, 32>}, {transform_indices = @transform_13, window_bounds = array<i64: 1, 8, 32>}]} {
    %c0 = arith.constant 0 : index
    %c0_0 = arith.constant 0 : index
    %c0_1 = arith.constant 0 : index
    %0 = vector.load %arg1[%c0, %c0_0, %c0_1] : memref<1x8x32xf32, #tpu.memory_space<vmem>>, vector<1x8x32xf32>
    %1 = vector.shape_cast %0 : vector<1x8x32xf32> to vector<8x32xf32>
    %2 = arith.truncf %1 : vector<8x32xf32> to vector<8x32xbf16>
    %c0_2 = arith.constant 0 : index
    %c0_3 = arith.constant 0 : index
    %3 = vector.load %arg2[%c0_2, %c0_3] : memref<32x96xbf16, #tpu.memory_space<vmem>>, vector<32x96xbf16>
    %cst = arith.constant dense<0.000000e+00> : vector<8x96xf32>
    %4 = tpu.matmul %2, %3, %cst {dimension_numbers = #tpu.dot_dimension_numbers<[1], [0], [0], [1], [0, 0, 1, 1], [], []>} : vector<8x32xbf16>, vector<32x96xbf16>, vector<8x96xf32> -> vector<8x96xf32>
    %c0_4 = arith.constant 0 : index
    %c0_5 = arith.constant 0 : index
    %5 = vector.load %arg3[%c0_4, %c0_5] : memref<1x96xf32, #tpu.memory_space<vmem>>, vector<1x96xf32>
    %6 = vector.broadcast %5 : vector<1x96xf32> to vector<8x96xf32>
    %7 = arith.addf %4, %6 : vector<8x96xf32>
    %8 = vector.extract_strided_slice %7 {offsets = [0, 0], sizes = [8, 32], strides = [1, 1]} : vector<8x96xf32> to vector<8x32xf32>
    %9 = vector.extract_strided_slice %8 {offsets = [0, 0], sizes = [8, 4], strides = [1, 1]} : vector<8x32xf32> to vector<8x4xf32>
    %10 = vector.shape_cast %9 : vector<8x4xf32> to vector<1x8x4xf32>
    %11 = vector.extract_strided_slice %8 {offsets = [0, 4], sizes = [8, 4], strides = [1, 1]} : vector<8x32xf32> to vector<8x4xf32>
    %12 = vector.shape_cast %11 : vector<8x4xf32> to vector<1x8x4xf32>
    %13 = vector.extract_strided_slice %8 {offsets = [0, 8], sizes = [8, 4], strides = [1, 1]} : vector<8x32xf32> to vector<8x4xf32>
    %14 = vector.shape_cast %13 : vector<8x4xf32> to vector<1x8x4xf32>
    %15 = vector.extract_strided_slice %8 {offsets = [0, 12], sizes = [8, 4], strides = [1, 1]} : vector<8x32xf32> to vector<8x4xf32>
    %16 = vector.shape_cast %15 : vector<8x4xf32> to vector<1x8x4xf32>
    %17 = vector.extract_strided_slice %8 {offsets = [0, 16], sizes = [8, 4], strides = [1, 1]} : vector<8x32xf32> to vector<8x4xf32>
    %18 = vector.shape_cast %17 : vector<8x4xf32> to vector<1x8x4xf32>
    %19 = vector.extract_strided_slice %8 {offsets = [0, 20], sizes = [8, 4], strides = [1, 1]} : vector<8x32xf32> to vector<8x4xf32>
    %20 = vector.shape_cast %19 : vector<8x4xf32> to vector<1x8x4xf32>
    %21 = vector.extract_strided_slice %8 {offsets = [0, 24], sizes = [8, 4], strides = [1, 1]} : vector<8x32xf32> to vector<8x4xf32>
    %22 = vector.shape_cast %21 : vector<8x4xf32> to vector<1x8x4xf32>
    %23 = vector.extract_strided_slice %8 {offsets = [0, 28], sizes = [8, 4], strides = [1, 1]} : vector<8x32xf32> to vector<8x4xf32>
    %24 = vector.shape_cast %23 : vector<8x4xf32> to vector<1x8x4xf32>
    %25 = tpu.concatenate %10, %12, %14, %16, %18, %20, %22, %24 in 0 : vector<1x8x4xf32>, vector<1x8x4xf32>, vector<1x8x4xf32>, vector<1x8x4xf32>, vector<1x8x4xf32>, vector<1x8x4xf32>, vector<1x8x4xf32>, vector<1x8x4xf32> -> vector<8x8x4xf32>
    %26 = vector.extract_strided_slice %7 {offsets = [0, 32], sizes = [8, 32], strides = [1, 1]} : vector<8x96xf32> to vector<8x32xf32>
    %27 = vector.extract_strided_slice %26 {offsets = [0, 0], sizes = [8, 4], strides = [1, 1]} : vector<8x32xf32> to vector<8x4xf32>
    %28 = vector.shape_cast %27 : vector<8x4xf32> to vector<1x8x4xf32>
    %29 = vector.extract_strided_slice %26 {offsets = [0, 4], sizes = [8, 4], strides = [1, 1]} : vector<8x32xf32> to vector<8x4xf32>
    %30 = vector.shape_cast %29 : vector<8x4xf32> to vector<1x8x4xf32>
    %31 = vector.extract_strided_slice %26 {offsets = [0, 8], sizes = [8, 4], strides = [1, 1]} : vector<8x32xf32> to vector<8x4xf32>
    %32 = vector.shape_cast %31 : vector<8x4xf32> to vector<1x8x4xf32>
    %33 = vector.extract_strided_slice %26 {offsets = [0, 12], sizes = [8, 4], strides = [1, 1]} : vector<8x32xf32> to vector<8x4xf32>
    %34 = vector.shape_cast %33 : vector<8x4xf32> to vector<1x8x4xf32>
    %35 = vector.extract_strided_slice %26 {offsets = [0, 16], sizes = [8, 4], strides = [1, 1]} : vector<8x32xf32> to vector<8x4xf32>
    %36 = vector.shape_cast %35 : vector<8x4xf32> to vector<1x8x4xf32>
    %37 = vector.extract_strided_slice %26 {offsets = [0, 20], sizes = [8, 4], strides = [1, 1]} : vector<8x32xf32> to vector<8x4xf32>
    %38 = vector.shape_cast %37 : vector<8x4xf32> to vector<1x8x4xf32>
    %39 = vector.extract_strided_slice %26 {offsets = [0, 24], sizes = [8, 4], strides = [1, 1]} : vector<8x32xf32> to vector<8x4xf32>
    %40 = vector.shape_cast %39 : vector<8x4xf32> to vector<1x8x4xf32>
    %41 = vector.extract_strided_slice %26 {offsets = [0, 28], sizes = [8, 4], strides = [1, 1]} : vector<8x32xf32> to vector<8x4xf32>
    %42 = vector.shape_cast %41 : vector<8x4xf32> to vector<1x8x4xf32>
    %43 = tpu.concatenate %28, %30, %32, %34, %36, %38, %40, %42 in 0 : vector<1x8x4xf32>, vector<1x8x4xf32>, vector<1x8x4xf32>, vector<1x8x4xf32>, vector<1x8x4xf32>, vector<1x8x4xf32>, vector<1x8x4xf32>, vector<1x8x4xf32> -> vector<8x8x4xf32>
    %44 = vector.extract_strided_slice %7 {offsets = [0, 64], sizes = [8, 32], strides = [1, 1]} : vector<8x96xf32> to vector<8x32xf32>
    %45 = vector.extract_strided_slice %44 {offsets = [0, 0], sizes = [8, 4], strides = [1, 1]} : vector<8x32xf32> to vector<8x4xf32>
    %46 = vector.shape_cast %45 : vector<8x4xf32> to vector<1x8x4xf32>
    %47 = vector.extract_strided_slice %44 {offsets = [0, 4], sizes = [8, 4], strides = [1, 1]} : vector<8x32xf32> to vector<8x4xf32>
    %48 = vector.shape_cast %47 : vector<8x4xf32> to vector<1x8x4xf32>
    %49 = vector.extract_strided_slice %44 {offsets = [0, 8], sizes = [8, 4], strides = [1, 1]} : vector<8x32xf32> to vector<8x4xf32>
    %50 = vector.shape_cast %49 : vector<8x4xf32> to vector<1x8x4xf32>
    %51 = vector.extract_strided_slice %44 {offsets = [0, 12], sizes = [8, 4], strides = [1, 1]} : vector<8x32xf32> to vector<8x4xf32>
    %52 = vector.shape_cast %51 : vector<8x4xf32> to vector<1x8x4xf32>
    %53 = vector.extract_strided_slice %44 {offsets = [0, 16], sizes = [8, 4], strides = [1, 1]} : vector<8x32xf32> to vector<8x4xf32>
    %54 = vector.shape_cast %53 : vector<8x4xf32> to vector<1x8x4xf32>
    %55 = vector.extract_strided_slice %44 {offsets = [0, 20], sizes = [8, 4], strides = [1, 1]} : vector<8x32xf32> to vector<8x4xf32>
    %56 = vector.shape_cast %55 : vector<8x4xf32> to vector<1x8x4xf32>
    %57 = vector.extract_strided_slice %44 {offsets = [0, 24], sizes = [8, 4], strides = [1, 1]} : vector<8x32xf32> to vector<8x4xf32>
    %58 = vector.shape_cast %57 : vector<8x4xf32> to vector<1x8x4xf32>
    %59 = vector.extract_strided_slice %44 {offsets = [0, 28], sizes = [8, 4], strides = [1, 1]} : vector<8x32xf32> to vector<8x4xf32>
    %60 = vector.shape_cast %59 : vector<8x4xf32> to vector<1x8x4xf32>
    %61 = tpu.concatenate %46, %48, %50, %52, %54, %56, %58, %60 in 0 : vector<1x8x4xf32>, vector<1x8x4xf32>, vector<1x8x4xf32>, vector<1x8x4xf32>, vector<1x8x4xf32>, vector<1x8x4xf32>, vector<1x8x4xf32>, vector<1x8x4xf32> -> vector<8x8x4xf32>
    "tpu.trace_start"() <{level = 10 : i32, message = "gqd,gkd->gqk"}> : () -> ()
    %cst_6 = arith.constant dense<0.000000e+00> : vector<8x8x8xf32>
    %62 = tpu.matmul %25, %43, %cst_6 {dimension_numbers = #tpu.dot_dimension_numbers<[2], [2], [1], [1], [0, 0, 0, 1, 1, 1], [0], [0]>} : vector<8x8x4xf32>, vector<8x8x4xf32>, vector<8x8x8xf32> -> vector<8x8x8xf32>
    "tpu.trace_stop"() : () -> ()
    %cst_7 = arith.constant dense<0xFF800000> : vector<8x8xf32>
    %63 = vector.multi_reduction <maximumf>, %62, %cst_7 [2] : vector<8x8x8xf32> to vector<8x8xf32>
    %64 = vector.shape_cast %63 : vector<8x8xf32> to vector<8x8x1xf32>
    %65 = vector.broadcast %64 : vector<8x8x1xf32> to vector<8x8x8xf32>
    %66 = arith.subf %62, %65 : vector<8x8x8xf32>
    %67 = math.exp %66 : vector<8x8x8xf32>
    %cst_8 = arith.constant dense<0.000000e+00> : vector<8x8xf32>
    %68 = vector.multi_reduction <add>, %67, %cst_8 [2] : vector<8x8x8xf32> to vector<8x8xf32>
    %69 = vector.shape_cast %68 : vector<8x8xf32> to vector<8x8x1xf32>
    %70 = tpu.reciprocal %69 {approx = true} : vector<8x8x1xf32> -> vector<8x8x1xf32>
    %71 = vector.broadcast %70 : vector<8x8x1xf32> to vector<8x8x8xf32>
    %72 = arith.mulf %67, %71 : vector<8x8x8xf32>
    "tpu.trace_start"() <{level = 10 : i32, message = "gqk,gkd->gqd"}> : () -> ()
    %cst_9 = arith.constant dense<0.000000e+00> : vector<8x8x4xf32>
    %73 = tpu.matmul %72, %61, %cst_9 {dimension_numbers = #tpu.dot_dimension_numbers<[2], [1], [1], [2], [0, 0, 0, 1, 1, 2], [0], [0]>} : vector<8x8x8xf32>, vector<8x8x4xf32>, vector<8x8x4xf32> -> vector<8x8x4xf32>
    "tpu.trace_stop"() : () -> ()
    %74 = vector.extract_strided_slice %73 {offsets = [0, 0, 0], sizes = [1, 8, 4], strides = [1, 1, 1]} : vector<8x8x4xf32> to vector<1x8x4xf32>
    %75 = vector.shape_cast %74 : vector<1x8x4xf32> to vector<8x4xf32>
    %76 = vector.extract_strided_slice %73 {offsets = [1, 0, 0], sizes = [1, 8, 4], strides = [1, 1, 1]} : vector<8x8x4xf32> to vector<1x8x4xf32>
    %77 = vector.shape_cast %76 : vector<1x8x4xf32> to vector<8x4xf32>
    %78 = vector.extract_strided_slice %73 {offsets = [2, 0, 0], sizes = [1, 8, 4], strides = [1, 1, 1]} : vector<8x8x4xf32> to vector<1x8x4xf32>
    %79 = vector.shape_cast %78 : vector<1x8x4xf32> to vector<8x4xf32>
    %80 = vector.extract_strided_slice %73 {offsets = [3, 0, 0], sizes = [1, 8, 4], strides = [1, 1, 1]} : vector<8x8x4xf32> to vector<1x8x4xf32>
    %81 = vector.shape_cast %80 : vector<1x8x4xf32> to vector<8x4xf32>
    %82 = vector.extract_strided_slice %73 {offsets = [4, 0, 0], sizes = [1, 8, 4], strides = [1, 1, 1]} : vector<8x8x4xf32> to vector<1x8x4xf32>
    %83 = vector.shape_cast %82 : vector<1x8x4xf32> to vector<8x4xf32>
    %84 = vector.extract_strided_slice %73 {offsets = [5, 0, 0], sizes = [1, 8, 4], strides = [1, 1, 1]} : vector<8x8x4xf32> to vector<1x8x4xf32>
    %85 = vector.shape_cast %84 : vector<1x8x4xf32> to vector<8x4xf32>
    %86 = vector.extract_strided_slice %73 {offsets = [6, 0, 0], sizes = [1, 8, 4], strides = [1, 1, 1]} : vector<8x8x4xf32> to vector<1x8x4xf32>
    %87 = vector.shape_cast %86 : vector<1x8x4xf32> to vector<8x4xf32>
    %88 = vector.extract_strided_slice %73 {offsets = [7, 0, 0], sizes = [1, 8, 4], strides = [1, 1, 1]} : vector<8x8x4xf32> to vector<1x8x4xf32>
    %89 = vector.shape_cast %88 : vector<1x8x4xf32> to vector<8x4xf32>
    %90 = tpu.concatenate %75, %77, %79, %81, %83, %85, %87, %89 in 1 : vector<8x4xf32>, vector<8x4xf32>, vector<8x4xf32>, vector<8x4xf32>, vector<8x4xf32>, vector<8x4xf32>, vector<8x4xf32>, vector<8x4xf32> -> vector<8x32xf32>
    %91 = arith.truncf %90 : vector<8x32xf32> to vector<8x32xbf16>
    %c0_10 = arith.constant 0 : index
    %c0_11 = arith.constant 0 : index
    %92 = vector.load %arg4[%c0_10, %c0_11] : memref<32x32xbf16, #tpu.memory_space<vmem>>, vector<32x32xbf16>
    %cst_12 = arith.constant dense<0.000000e+00> : vector<8x32xf32>
    %93 = tpu.matmul %91, %92, %cst_12 {dimension_numbers = #tpu.dot_dimension_numbers<[1], [0], [0], [1], [0, 0, 1, 1], [], []>} : vector<8x32xbf16>, vector<32x32xbf16>, vector<8x32xf32> -> vector<8x32xf32>
    %c0_13 = arith.constant 0 : index
    %c0_14 = arith.constant 0 : index
    %94 = vector.load %arg5[%c0_13, %c0_14] : memref<1x32xf32, #tpu.memory_space<vmem>>, vector<1x32xf32>
    %95 = vector.broadcast %94 : vector<1x32xf32> to vector<8x32xf32>
    %96 = arith.addf %93, %95 : vector<8x32xf32>
    %97 = arith.addf %96, %1 : vector<8x32xf32>
    %cst_15 = arith.constant dense<0.000000e+00> : vector<8xf32>
    %98 = vector.multi_reduction <add>, %97, %cst_15 [1] : vector<8x32xf32> to vector<8xf32>
    %99 = vector.shape_cast %98 : vector<8xf32> to vector<8x1xf32>
    %cst_16 = arith.constant 3.125000e-02 : f32
    %100 = vector.broadcast %cst_16 : f32 to vector<8x1xf32>
    %101 = arith.mulf %99, %100 : vector<8x1xf32>
    %102 = arith.mulf %97, %97 : vector<8x32xf32>
    %cst_17 = arith.constant dense<0.000000e+00> : vector<8xf32>
    %103 = vector.multi_reduction <add>, %102, %cst_17 [1] : vector<8x32xf32> to vector<8xf32>
    %104 = vector.shape_cast %103 : vector<8xf32> to vector<8x1xf32>
    %cst_18 = arith.constant 3.125000e-02 : f32
    %105 = vector.broadcast %cst_18 : f32 to vector<8x1xf32>
    %106 = arith.mulf %104, %105 : vector<8x1xf32>
    %107 = vector.broadcast %101 : vector<8x1xf32> to vector<8x32xf32>
    %108 = arith.subf %97, %107 : vector<8x32xf32>
    %109 = arith.mulf %101, %101 : vector<8x1xf32>
    %110 = arith.subf %106, %109 : vector<8x1xf32>
    %cst_19 = arith.constant 9.99999974E-6 : f32
    %111 = vector.broadcast %cst_19 : f32 to vector<8x1xf32>
    %112 = arith.addf %110, %111 : vector<8x1xf32>
    %113 = math.rsqrt %112 : vector<8x1xf32>
    %114 = vector.broadcast %113 : vector<8x1xf32> to vector<8x32xf32>
    %115 = arith.mulf %108, %114 : vector<8x32xf32>
    %c0_20 = arith.constant 0 : index
    %c0_21 = arith.constant 0 : index
    %116 = vector.load %arg6[%c0_20, %c0_21] : memref<1x32xf32, #tpu.memory_space<vmem>>, vector<1x32xf32>
    %117 = vector.broadcast %116 : vector<1x32xf32> to vector<8x32xf32>
    %118 = arith.mulf %115, %117 : vector<8x32xf32>
    %c0_22 = arith.constant 0 : index
    %c0_23 = arith.constant 0 : index
    %119 = vector.load %arg7[%c0_22, %c0_23] : memref<1x32xf32, #tpu.memory_space<vmem>>, vector<1x32xf32>
    %120 = vector.broadcast %119 : vector<1x32xf32> to vector<8x32xf32>
    %121 = arith.addf %118, %120 : vector<8x32xf32>
    %122 = arith.truncf %121 : vector<8x32xf32> to vector<8x32xbf16>
    %c0_24 = arith.constant 0 : index
    %c0_25 = arith.constant 0 : index
    %123 = vector.load %arg8[%c0_24, %c0_25] : memref<32x64xbf16, #tpu.memory_space<vmem>>, vector<32x64xbf16>
    %cst_26 = arith.constant dense<0.000000e+00> : vector<8x64xf32>
    %124 = tpu.matmul %122, %123, %cst_26 {dimension_numbers = #tpu.dot_dimension_numbers<[1], [0], [0], [1], [0, 0, 1, 1], [], []>} : vector<8x32xbf16>, vector<32x64xbf16>, vector<8x64xf32> -> vector<8x64xf32>
    %c0_27 = arith.constant 0 : index
    %c0_28 = arith.constant 0 : index
    %125 = vector.load %arg9[%c0_27, %c0_28] : memref<1x64xf32, #tpu.memory_space<vmem>>, vector<1x64xf32>
    %126 = vector.broadcast %125 : vector<1x64xf32> to vector<8x64xf32>
    %127 = arith.addf %124, %126 : vector<8x64xf32>
    %cst_29 = arith.constant 0.000000e+00 : f32
    %128 = vector.broadcast %cst_29 : f32 to vector<8x64xf32>
    %129 = arith.maximumf %127, %128 : vector<8x64xf32>
    %130 = arith.truncf %129 : vector<8x64xf32> to vector<8x64xbf16>
    %c0_30 = arith.constant 0 : index
    %c0_31 = arith.constant 0 : index
    %131 = vector.load %arg10[%c0_30, %c0_31] : memref<64x32xbf16, #tpu.memory_space<vmem>>, vector<64x32xbf16>
    %cst_32 = arith.constant dense<0.000000e+00> : vector<8x32xf32>
    %132 = tpu.matmul %130, %131, %cst_32 {dimension_numbers = #tpu.dot_dimension_numbers<[1], [0], [0], [1], [0, 0, 1, 1], [], []>} : vector<8x64xbf16>, vector<64x32xbf16>, vector<8x32xf32> -> vector<8x32xf32>
    %c0_33 = arith.constant 0 : index
    %c0_34 = arith.constant 0 : index
    %133 = vector.load %arg11[%c0_33, %c0_34] : memref<1x32xf32, #tpu.memory_space<vmem>>, vector<1x32xf32>
    %134 = vector.broadcast %133 : vector<1x32xf32> to vector<8x32xf32>
    %135 = arith.addf %132, %134 : vector<8x32xf32>
    %136 = arith.addf %135, %121 : vector<8x32xf32>
    %cst_35 = arith.constant dense<0.000000e+00> : vector<8xf32>
    %137 = vector.multi_reduction <add>, %136, %cst_35 [1] : vector<8x32xf32> to vector<8xf32>
    %138 = vector.shape_cast %137 : vector<8xf32> to vector<8x1xf32>
    %cst_36 = arith.constant 3.125000e-02 : f32
    %139 = vector.broadcast %cst_36 : f32 to vector<8x1xf32>
    %140 = arith.mulf %138, %139 : vector<8x1xf32>
    %141 = arith.mulf %136, %136 : vector<8x32xf32>
    %cst_37 = arith.constant dense<0.000000e+00> : vector<8xf32>
    %142 = vector.multi_reduction <add>, %141, %cst_37 [1] : vector<8x32xf32> to vector<8xf32>
    %143 = vector.shape_cast %142 : vector<8xf32> to vector<8x1xf32>
    %cst_38 = arith.constant 3.125000e-02 : f32
    %144 = vector.broadcast %cst_38 : f32 to vector<8x1xf32>
    %145 = arith.mulf %143, %144 : vector<8x1xf32>
    %146 = vector.broadcast %140 : vector<8x1xf32> to vector<8x32xf32>
    %147 = arith.subf %136, %146 : vector<8x32xf32>
    %148 = arith.mulf %140, %140 : vector<8x1xf32>
    %149 = arith.subf %145, %148 : vector<8x1xf32>
    %cst_39 = arith.constant 9.99999974E-6 : f32
    %150 = vector.broadcast %cst_39 : f32 to vector<8x1xf32>
    %151 = arith.addf %149, %150 : vector<8x1xf32>
    %152 = math.rsqrt %151 : vector<8x1xf32>
    %153 = vector.broadcast %152 : vector<8x1xf32> to vector<8x32xf32>
    %154 = arith.mulf %147, %153 : vector<8x32xf32>
    %c0_40 = arith.constant 0 : index
    %c0_41 = arith.constant 0 : index
    %155 = vector.load %arg12[%c0_40, %c0_41] : memref<1x32xf32, #tpu.memory_space<vmem>>, vector<1x32xf32>
    %156 = vector.broadcast %155 : vector<1x32xf32> to vector<8x32xf32>
    %157 = arith.mulf %154, %156 : vector<8x32xf32>
    %c0_42 = arith.constant 0 : index
    %c0_43 = arith.constant 0 : index
    %158 = vector.load %arg13[%c0_42, %c0_43] : memref<1x32xf32, #tpu.memory_space<vmem>>, vector<1x32xf32>
    %159 = vector.broadcast %158 : vector<1x32xf32> to vector<8x32xf32>
    %160 = arith.addf %157, %159 : vector<8x32xf32>
    %161 = vector.shape_cast %160 : vector<8x32xf32> to vector<1x8x32xf32>
    %c0_44 = arith.constant 0 : index
    %c0_45 = arith.constant 0 : index
    %c0_46 = arith.constant 0 : index
    %162 = vector.load %arg14[%c0_44, %c0_45, %c0_46] : memref<1x8x32xf32, #tpu.memory_space<vmem>>, vector<1x8x32xf32>
    tpu.vector_store %arg14[%c0_44, %c0_45, %c0_46], %161 {strides = array<i32>} : memref<1x8x32xf32, #tpu.memory_space<vmem>>, vector<1x8x32xf32>,
    return
  }
  func.func @transform_0(%arg0: i32) -> (i32, i32, i32) {
    %c0_i32 = arith.constant 0 : i32
    %c0_i32_0 = arith.constant 0 : i32
    %c0_i32_1 = arith.constant 0 : i32
    return %arg0, %c0_i32, %c0_i32_0 : i32, i32, i32
  }
  func.func @transform_1(%arg0: i32) -> (i32, i32) {
    %c0_i32 = arith.constant 0 : i32
    %c0_i32_0 = arith.constant 0 : i32
    %c0_i32_1 = arith.constant 0 : i32
    return %c0_i32, %c0_i32_0 : i32, i32
  }
  func.func @transform_2(%arg0: i32) -> (i32, i32) {
    %c0_i32 = arith.constant 0 : i32
    %c0_i32_0 = arith.constant 0 : i32
    %c0_i32_1 = arith.constant 0 : i32
    return %c0_i32, %c0_i32_0 : i32, i32
  }
  func.func @transform_3(%arg0: i32) -> (i32, i32) {
    %c0_i32 = arith.constant 0 : i32
    %c0_i32_0 = arith.constant 0 : i32
    %c0_i32_1 = arith.constant 0 : i32
    return %c0_i32, %c0_i32_0 : i32, i32
  }
  func.func @transform_4(%arg0: i32) -> (i32, i32) {
    %c0_i32 = arith.constant 0 : i32
    %c0_i32_0 = arith.constant 0 : i32
    %c0_i32_1 = arith.constant 0 : i32
    return %c0_i32, %c0_i32_0 : i32, i32
  }
  func.func @transform_5(%arg0: i32) -> (i32, i32) {
    %c0_i32 = arith.constant 0 : i32
    %c0_i32_0 = arith.constant 0 : i32
    %c0_i32_1 = arith.constant 0 : i32
    return %c0_i32, %c0_i32_0 : i32, i32
  }
  func.func @transform_6(%arg0: i32) -> (i32, i32) {
    %c0_i32 = arith.constant 0 : i32
    %c0_i32_0 = arith.constant 0 : i32
    %c0_i32_1 = arith.constant 0 : i32
    return %c0_i32, %c0_i32_0 : i32, i32
  }
  func.func @transform_7(%arg0: i32) -> (i32, i32) {
    %c0_i32 = arith.constant 0 : i32
    %c0_i32_0 = arith.constant 0 : i32
    %c0_i32_1 = arith.constant 0 : i32
    return %c0_i32, %c0_i32_0 : i32, i32
  }
  func.func @transform_8(%arg0: i32) -> (i32, i32) {
    %c0_i32 = arith.constant 0 : i32
    %c0_i32_0 = arith.constant 0 : i32
    %c0_i32_1 = arith.constant 0 : i32
    return %c0_i32, %c0_i32_0 : i32, i32
  }
  func.func @transform_9(%arg0: i32) -> (i32, i32) {
    %c0_i32 = arith.constant 0 : i32
    %c0_i32_0 = arith.constant 0 : i32
    %c0_i32_1 = arith.constant 0 : i32
    return %c0_i32, %c0_i32_0 : i32, i32
  }
  func.func @transform_10(%arg0: i32) -> (i32, i32) {
    %c0_i32 = arith.constant 0 : i32
    %c0_i32_0 = arith.constant 0 : i32
    %c0_i32_1 = arith.constant 0 : i32
    return %c0_i32, %c0_i32_0 : i32, i32
  }
  func.func @transform_11(%arg0: i32) -> (i32, i32) {
    %c0_i32 = arith.constant 0 : i32
    %c0_i32_0 = arith.constant 0 : i32
    %c0_i32_1 = arith.constant 0 : i32
    return %c0_i32, %c0_i32_0 : i32, i32
  }
  func.func @transform_12(%arg0: i32) -> (i32, i32) {
    %c0_i32 = arith.constant 0 : i32
    %c0_i32_0 = arith.constant 0 : i32
    %c0_i32_1 = arith.constant 0 : i32
    return %c0_i32, %c0_i32_0 : i32, i32
  }
  func.func @transform_13(%arg0: i32) -> (i32, i32, i32) {
    %c0_i32 = arith.constant 0 : i32
    %c0_i32_0 = arith.constant 0 : i32
    %c0_i32_1 = arith.constant 0 : i32
    return %arg0, %c0_i32, %c0_i32_0 : i32, i32, i32
  }
}

</mosaic_0001>

<llo_original>
// kernel: tpu_custom_call.1
$region0: #{tpu_custom_call.1}
  #allocation0 [shape = 'u32[]', space=smem, size = 0x4, offset = 0x4, fixed_abs, tag = 'smem constant byte address 0x4 - core index']
  #allocation1 [shape = 'u32[144,128]{1,0:T(1,128)}', space=vmem, size = 0x12000, scoped, tag = 'internal scratch']
  %s0 = inlined_call_operand.vmem [shape: f32[2,8,32], index: 0, kind: input, shape index: {}]
  %s1 = inlined_call_operand.vmem [shape: bf16[32,96], index: 1, kind: input, shape index: {}]
  %s2 = inlined_call_operand.hbm [shape: f32[1,96], index: 2, kind: input, shape index: {}]
  %s3 = inlined_call_operand.vmem [shape: bf16[32,32], index: 3, kind: input, shape index: {}]
  %s4 = inlined_call_operand.hbm [shape: f32[1,32], index: 4, kind: input, shape index: {}]
  %s5 = inlined_call_operand.hbm [shape: f32[1,32], index: 5, kind: input, shape index: {}]
  %s6 = inlined_call_operand.hbm [shape: f32[1,32], index: 6, kind: input, shape index: {}]
  %s7 = inlined_call_operand.hbm [shape: bf16[32,64], index: 7, kind: input, shape index: {}]
  %s8 = inlined_call_operand.hbm [shape: f32[1,64], index: 8, kind: input, shape index: {}]
  %s9 = inlined_call_operand.vmem [shape: bf16[64,32], index: 9, kind: input, shape index: {}]
  %s10 = inlined_call_operand.vmem [shape: f32[1,32], index: 10, kind: input, shape index: {}]
  %s11 = inlined_call_operand.vmem [shape: f32[1,32], index: 11, kind: input, shape index: {}]
  %s12 = inlined_call_operand.vmem [shape: f32[1,32], index: 12, kind: input, shape index: {}]
  %s13 = inlined_call_operand.hbm [shape: f32[2,8,32], index: 13, kind: output, shape index: {}]
  %s14 = sld [smem:[#allocation0]]
  $region109: #{tpu_custom_call.1} parent=0
    _
  %s16 = ssub.s32 1, %s14
  %s17 = scalar_select 0, %s16, %s14
  $region1: #{tpu_custom_call.1} parent=0
    #allocation2 [shape = 'u8[512]{0}', space=vmem, size = 0x400, scoped, tag = 'input window, operand 2, single buffered']
    #allocation3 [shape = 's32[2]{0}', space=sflag, size = 0x8, scoped, tag = 'scoped memory for tpu_custom_call.1']
    #allocation4 [shape = 's32[2]{0}', space=sflag, size = 0x8, scoped, tag = 'scoped memory for tpu_custom_call.1']
    #allocation5 [shape = 'u8[512]{0}', space=vmem, size = 0x400, scoped, tag = 'input window, operand 4, single buffered']
    #allocation6 [shape = 's32[1]{0}', space=sflag, size = 0x4, scoped, tag = 'scoped memory for tpu_custom_call.1']
    #allocation7 [shape = 'u8[512]{0}', space=vmem, size = 0x400, scoped, tag = 'input window, operand 5, single buffered']
    #allocation8 [shape = 'u8[512]{0}', space=vmem, size = 0x400, scoped, tag = 'input window, operand 6, single buffered']
    #allocation9 [shape = 's32[1]{0}', space=sflag, size = 0x4, scoped, tag = 'scoped memory for tpu_custom_call.1']
    #allocation10 [shape = 'u8[8192]{0}', space=vmem, size = 0x2000, scoped, tag = 'input window, operand 7, single buffered']
    #allocation11 [shape = 'u8[512]{0}', space=vmem, size = 0x400, scoped, tag = 'input window, operand 8, single buffered']
    #allocation12 [shape = 's32[1]{0}', space=sflag, size = 0x4, scoped, tag = 'scoped memory for tpu_custom_call.1']
    #allocation13 [shape = 'u8[8192]{0}', space=vmem, size = 0x2000, scoped, tag = 'output window, operand 0']
    %18 = vsyncpa [#allocation3], 0
    %19 = vsyncpa [#allocation6], 0
    %20 = vsyncpa [#allocation9], 0
    %21 = vsyncpa [#allocation12], 0
    %22 = vsyncpa [#allocation4], 0
    %s23 = scalar_lea.sflag [#allocation4], 1
    %24 = vsyncpa %s23, 0
    loop: start=0, step=1, limit=4
    $region2: #{tpu_custom_call.1} parent=1 // loop_pre_header
      _
    $region3: #{tpu_custom_call.1} parent=1 // loop_header
      %s26 = sphi 0, %s30
      %p27 = scmp.ge.s32.totalorder %s26, 4
      %s36 = sphi 0, %s38
      %s39 = sphi 0, %s36
      %s40 = sphi 0, %s39
      %s56 = sphi 0, %s40
      %s60 = sphi 0, %s60
      %s62 = sphi 0, %s60
      %s63 = sphi 0, %s62
      %s77 = sphi 0, %s63
      %s81 = sphi 0, %s81
      %s83 = sphi 0, %s81
      %s84 = sphi 0, %s83
      %s98 = sphi 0, %s84
      %s102 = sphi 0, %s102
      %s104 = sphi 0, %s102
      %s105 = sphi 0, %s104
      %s119 = sphi 0, %s105
      %s123 = sphi 0, %s123
      %s125 = sphi 0, %s123
      %s126 = sphi 0, %s125
      %s140 = sphi 0, %s126
      %s144 = sphi 0, %s144
      %s146 = sphi 0, %s144
      %s147 = sphi 0, %s146
      %s161 = sphi 0, %s147
      %s165 = sphi 0, %s165
      %s167 = sphi 0, %s165
      %s168 = sphi 0, %s167
      %s182 = sphi 0, %s168
      %s186 = sphi 0, %s186
      %s188 = sphi 0, %s186
      %s189 = sphi 0, %s188
      %s203 = sphi 0, %s189
      %s207 = sphi 0, %s207
      %s209 = sphi 0, %s207
      %s210 = sphi 0, %s209
      %s224 = sphi 0, %s210
      %s228 = sphi 0, %s228
      %s230 = sphi 0, %s228
      %s231 = sphi 0, %s230
      %s245 = sphi 0, %s231
      %s249 = sphi 0, %s249
      %s251 = sphi 0, %s249
      %s252 = sphi 0, %s251
      %s266 = sphi 0, %s252
      %s270 = sphi 0, %s270
      %s272 = sphi 0, %s270
      %s273 = sphi 0, %s272
      %s287 = sphi 0, %s273
      %s291 = sphi 0, %s291
      %s293 = sphi 0, %s291
      %s294 = sphi 0, %s293
      %s308 = sphi 0, %s294
      %s314 = sphi 0, %s316
      %s317 = sphi 0, %s314
      %s318 = sphi 0, %s317
      %s334 = sphi 0, %s318
    $region4: #{tpu_custom_call.1} parent=1 // loop_header_branch
      %29 = sbr.rel (%p27) target = $region8
    $region5: #{tpu_custom_call.1} parent=1 // loop_body
      %s31 = ssub.s32 %s26, 1
      %s32 = ssub.s32 %s26, 2
      %s33 = sadd.s32 %s26, 1
      %s34 = ssub.s32 %s26, %s33
      %p35 = scmp.eq.s32.totalorder %s34, 0
      %s37 = sadd.s32 %s36, 1
      %s38 = scalar_select %p35, %s36, %s37
      %p41 = pneg %p35
      %p42 = scmp.eq.s32.totalorder %s26, 1
      %p43 = por %p41, %p42
      %p44 = scmp.ne.s32.totalorder %s36, %s39
      %p45 = scmp.eq.s32.totalorder %s26, 0
      %p46 = por %p44, %p45
      %p47 = scmp.ne.s32.totalorder %s36, %s39
      %p48 = scmp.eq.s32.totalorder %s31, 1
      %p49 = por %p47, %p48
      %p50 = scmp.ne.s32.totalorder %s39, %s40
      %p51 = scmp.eq.s32.totalorder %s31, 0
      %p52 = por %p50, %p51
      %p53 = scmp.ne.s32.totalorder %s39, %s40
      %p54 = scmp.eq.s32.totalorder %s32, 1
      %p55 = por %p53, %p54
      %p57 = scmp.ne.s32.totalorder %s40, %s56
      %p58 = scmp.eq.s32.totalorder %s32, 0
      %p59 = por %p57, %p58
      %s61 = sadd.s32 %s60, 1
      %p64 = scmp.eq.s32.totalorder %s26, 1
      %p65 = scmp.ne.s32.totalorder %s60, %s62
      %p66 = scmp.eq.s32.totalorder %s26, 0
      %p67 = por %p65, %p66
      %p68 = scmp.ne.s32.totalorder %s60, %s62
      %p69 = scmp.eq.s32.totalorder %s31, 1
      %p70 = por %p68, %p69
      %p71 = scmp.ne.s32.totalorder %s62, %s63
      %p72 = scmp.eq.s32.totalorder %s31, 0
      %p73 = por %p71, %p72
      %p74 = scmp.ne.s32.totalorder %s62, %s63
      %p75 = scmp.eq.s32.totalorder %s32, 1
      %p76 = por %p74, %p75
      %p78 = scmp.ne.s32.totalorder %s63, %s77
      %p79 = scmp.eq.s32.totalorder %s32, 0
      %p80 = por %p78, %p79
      %s82 = sadd.s32 %s81, 1
      %p85 = scmp.eq.s32.totalorder %s26, 1
      %p86 = scmp.ne.s32.totalorder %s81, %s83
      %p87 = scmp.eq.s32.totalorder %s26, 0
      %p88 = por %p86, %p87
      %p89 = scmp.ne.s32.totalorder %s81, %s83
      %p90 = scmp.eq.s32.totalorder %s31, 1
      %p91 = por %p89, %p90
      %p92 = scmp.ne.s32.totalorder %s83, %s84
      %p93 = scmp.eq.s32.totalorder %s31, 0
      %p94 = por %p92, %p93
      %p95 = scmp.ne.s32.totalorder %s83, %s84
      %p96 = scmp.eq.s32.totalorder %s32, 1
      %p97 = por %p95, %p96
      %p99 = scmp.ne.s32.totalorder %s84, %s98
      %p100 = scmp.eq.s32.totalorder %s32, 0
      %p101 = por %p99, %p100
      %s103 = sadd.s32 %s102, 1
      %p106 = scmp.eq.s32.totalorder %s26, 1
      %p107 = scmp.ne.s32.totalorder %s102, %s104
      %p108 = scmp.eq.s32.totalorder %s26, 0
      %p109 = por %p107, %p108
      %p110 = scmp.ne.s32.totalorder %s102, %s104
      %p111 = scmp.eq.s32.totalorder %s31, 1
      %p112 = por %p110, %p111
      %p113 = scmp.ne.s32.totalorder %s104, %s105
      %p114 = scmp.eq.s32.totalorder %s31, 0
      %p115 = por %p113, %p114
      %p116 = scmp.ne.s32.totalorder %s104, %s105
      %p117 = scmp.eq.s32.totalorder %s32, 1
      %p118 = por %p116, %p117
      %p120 = scmp.ne.s32.totalorder %s105, %s119
      %p121 = scmp.eq.s32.totalorder %s32, 0
      %p122 = por %p120, %p121
      %s124 = sadd.s32 %s123, 1
      %p127 = scmp.eq.s32.totalorder %s26, 1
      %p128 = scmp.ne.s32.totalorder %s123, %s125
      %p129 = scmp.eq.s32.totalorder %s26, 0
      %p130 = por %p128, %p129
      %p131 = scmp.ne.s32.totalorder %s123, %s125
      %p132 = scmp.eq.s32.totalorder %s31, 1
      %p133 = por %p131, %p132
      %p134 = scmp.ne.s32.totalorder %s125, %s126
      %p135 = scmp.eq.s32.totalorder %s31, 0
      %p136 = por %p134, %p135
      %p137 = scmp.ne.s32.totalorder %s125, %s126
      %p138 = scmp.eq.s32.totalorder %s32, 1
      %p139 = por %p137, %p138
      %p141 = scmp.ne.s32.totalorder %s126, %s140
      %p142 = scmp.eq.s32.totalorder %s32, 0
      %p143 = por %p141, %p142
      %s145 = sadd.s32 %s144, 1
      %p148 = scmp.eq.s32.totalorder %s26, 1
      %p149 = scmp.ne.s32.totalorder %s144, %s146
      %p150 = scmp.eq.s32.totalorder %s26, 0
      %p151 = por %p149, %p150
      %p152 = scmp.ne.s32.totalorder %s144, %s146
      %p153 = scmp.eq.s32.totalorder %s31, 1
      %p154 = por %p152, %p153
      %p155 = scmp.ne.s32.totalorder %s146, %s147
      %p156 = scmp.eq.s32.totalorder %s31, 0
      %p157 = por %p155, %p156
      %p158 = scmp.ne.s32.totalorder %s146, %s147
      %p159 = scmp.eq.s32.totalorder %s32, 1
      %p160 = por %p158, %p159
      %p162 = scmp.ne.s32.totalorder %s147, %s161
      %p163 = scmp.eq.s32.totalorder %s32, 0
      %p164 = por %p162, %p163
      %s166 = sadd.s32 %s165, 1
      %p169 = scmp.eq.s32.totalorder %s26, 1
      %p170 = scmp.ne.s32.totalorder %s165, %s167
      %p171 = scmp.eq.s32.totalorder %s26, 0
      %p172 = por %p170, %p171
      %p173 = scmp.ne.s32.totalorder %s165, %s167
      %p174 = scmp.eq.s32.totalorder %s31, 1
      %p175 = por %p173, %p174
      %p176 = scmp.ne.s32.totalorder %s167, %s168
      %p177 = scmp.eq.s32.totalorder %s31, 0
      %p178 = por %p176, %p177
      %p179 = scmp.ne.s32.totalorder %s167, %s168
      %p180 = scmp.eq.s32.totalorder %s32, 1
      %p181 = por %p179, %p180
      %p183 = scmp.ne.s32.totalorder %s168, %s182
      %p184 = scmp.eq.s32.totalorder %s32, 0
      %p185 = por %p183, %p184
      %s187 = sadd.s32 %s186, 1
      %p190 = scmp.eq.s32.totalorder %s26, 1
      %p191 = scmp.ne.s32.totalorder %s186, %s188
      %p192 = scmp.eq.s32.totalorder %s26, 0
      %p193 = por %p191, %p192
      %p194 = scmp.ne.s32.totalorder %s186, %s188
      %p195 = scmp.eq.s32.totalorder %s31, 1
      %p196 = por %p194, %p195
      %p197 = scmp.ne.s32.totalorder %s188, %s189
      %p198 = scmp.eq.s32.totalorder %s31, 0
      %p199 = por %p197, %p198
      %p200 = scmp.ne.s32.totalorder %s188, %s189
      %p201 = scmp.eq.s32.totalorder %s32, 1
      %p202 = por %p200, %p201
      %p204 = scmp.ne.s32.totalorder %s189, %s203
      %p205 = scmp.eq.s32.totalorder %s32, 0
      %p206 = por %p204, %p205
      %s208 = sadd.s32 %s207, 1
      %p211 = scmp.eq.s32.totalorder %s26, 1
      %p212 = scmp.ne.s32.totalorder %s207, %s209
      %p213 = scmp.eq.s32.totalorder %s26, 0
      %p214 = por %p212, %p213
      %p215 = scmp.ne.s32.totalorder %s207, %s209
      %p216 = scmp.eq.s32.totalorder %s31, 1
      %p217 = por %p215, %p216
      %p218 = scmp.ne.s32.totalorder %s209, %s210
      %p219 = scmp.eq.s32.totalorder %s31, 0
      %p220 = por %p218, %p219
      %p221 = scmp.ne.s32.totalorder %s209, %s210
      %p222 = scmp.eq.s32.totalorder %s32, 1
      %p223 = por %p221, %p222
      %p225 = scmp.ne.s32.totalorder %s210, %s224
      %p226 = scmp.eq.s32.totalorder %s32, 0
      %p227 = por %p225, %p226
      %s229 = sadd.s32 %s228, 1
      %p232 = scmp.eq.s32.totalorder %s26, 1
      %p233 = scmp.ne.s32.totalorder %s228, %s230
      %p234 = scmp.eq.s32.totalorder %s26, 0
      %p235 = por %p233, %p234
      %p236 = scmp.ne.s32.totalorder %s228, %s230
      %p237 = scmp.eq.s32.totalorder %s31, 1
      %p238 = por %p236, %p237
      %p239 = scmp.ne.s32.totalorder %s230, %s231
      %p240 = scmp.eq.s32.totalorder %s31, 0
      %p241 = por %p239, %p240
      %p242 = scmp.ne.s32.totalorder %s230, %s231
      %p243 = scmp.eq.s32.totalorder %s32, 1
      %p244 = por %p242, %p243
      %p246 = scmp.ne.s32.totalorder %s231, %s245
      %p247 = scmp.eq.s32.totalorder %s32, 0
      %p248 = por %p246, %p247
      %s250 = sadd.s32 %s249, 1
      %p253 = scmp.eq.s32.totalorder %s26, 1
      %p254 = scmp.ne.s32.totalorder %s249, %s251
      %p255 = scmp.eq.s32.totalorder %s26, 0
      %p256 = por %p254, %p255
      %p257 = scmp.ne.s32.totalorder %s249, %s251
      %p258 = scmp.eq.s32.totalorder %s31, 1
      %p259 = por %p257, %p258
      %p260 = scmp.ne.s32.totalorder %s251, %s252
      %p261 = scmp.eq.s32.totalorder %s31, 0
      %p262 = por %p260, %p261
      %p263 = scmp.ne.s32.totalorder %s251, %s252
      %p264 = scmp.eq.s32.totalorder %s32, 1
      %p265 = por %p263, %p264
      %p267 = scmp.ne.s32.totalorder %s252, %s266
      %p268 = scmp.eq.s32.totalorder %s32, 0
      %p269 = por %p267, %p268
      %s271 = sadd.s32 %s270, 1
      %p274 = scmp.eq.s32.totalorder %s26, 1
      %p275 = scmp.ne.s32.totalorder %s270, %s272
      %p276 = scmp.eq.s32.totalorder %s26, 0
      %p277 = por %p275, %p276
      %p278 = scmp.ne.s32.totalorder %s270, %s272
      %p279 = scmp.eq.s32.totalorder %s31, 1
      %p280 = por %p278, %p279
      %p281 = scmp.ne.s32.totalorder %s272, %s273
      %p282 = scmp.eq.s32.totalorder %s31, 0
      %p283 = por %p281, %p282
      %p284 = scmp.ne.s32.totalorder %s272, %s273
      %p285 = scmp.eq.s32.totalorder %s32, 1
      %p286 = por %p284, %p285
      %p288 = scmp.ne.s32.totalorder %s273, %s287
      %p289 = scmp.eq.s32.totalorder %s32, 0
      %p290 = por %p288, %p289
      %s292 = sadd.s32 %s291, 1
      %p295 = scmp.eq.s32.totalorder %s26, 1
      %p296 = scmp.ne.s32.totalorder %s291, %s293
      %p297 = scmp.eq.s32.totalorder %s26, 0
      %p298 = por %p296, %p297
      %p299 = scmp.ne.s32.totalorder %s291, %s293
      %p300 = scmp.eq.s32.totalorder %s31, 1
      %p301 = por %p299, %p300
      %p302 = scmp.ne.s32.totalorder %s293, %s294
      %p303 = scmp.eq.s32.totalorder %s31, 0
      %p304 = por %p302, %p303
      %p305 = scmp.ne.s32.totalorder %s293, %s294
      %p306 = scmp.eq.s32.totalorder %s32, 1
      %p307 = por %p305, %p306
      %p309 = scmp.ne.s32.totalorder %s294, %s308
      %p310 = scmp.eq.s32.totalorder %s32, 0
      %p311 = por %p309, %p310
      %s312 = ssub.s32 %s26, %s33
      %p313 = scmp.eq.s32.totalorder %s312, 0
      %s315 = sadd.s32 %s314, 1
      %s316 = scalar_select %p313, %s314, %s315
      %p319 = pneg %p313
      %p320 = scmp.eq.s32.totalorder %s26, 1
      %p321 = por %p319, %p320
      %p322 = scmp.ne.s32.totalorder %s314, %s317
      %p323 = scmp.eq.s32.totalorder %s26, 0
      %p324 = por %p322, %p323
      %p325 = scmp.ne.s32.totalorder %s314, %s317
      %p326 = scmp.eq.s32.totalorder %s31, 1
      %p327 = por %p325, %p326
      %p328 = scmp.ne.s32.totalorder %s317, %s318
      %p329 = scmp.eq.s32.totalorder %s31, 0
      %p330 = por %p328, %p329
      %p331 = scmp.ne.s32.totalorder %s317, %s318
      %p332 = scmp.eq.s32.totalorder %s32, 1
      %p333 = por %p331, %p332
      %p335 = scmp.ne.s32.totalorder %s318, %s334
      %p336 = scmp.eq.s32.totalorder %s32, 0
      %p337 = por %p335, %p336
      %p338 = scmp.le.s32.totalorder 1, %s26
      %p339 = scmp.lt.s32.totalorder %s26, 3
      %p340 = pnand %p338, %p339
      %p341 = pneg %p340
      // Predicated region
      $region9: #{tpu_custom_call.1} parent=5 // pred_check
        _
      $region10: #{tpu_custom_call.1} parent=5 // pred_check_branch
        %343 = sbr.rel (%p340) target = $region12
      $region11: #{tpu_custom_call.1} parent=5 // pred_region
        %s344 = ssub.s32 %s26, 1
        // Predicated region
        $region13: #{tpu_custom_call.1} parent=11 // pred_check
          %p345 = pneg %p73
        $region14: #{tpu_custom_call.1} parent=11 // pred_check_branch
          %347 = sbr.rel (%p345) target = $region16
        $region15: #{tpu_custom_call.1} parent=11 // pred_region
          _
        $region16: #{tpu_custom_call.1} parent=11 // pred_fallthru
          _
        // Predicated region
        $region17: #{tpu_custom_call.1} parent=11 // pred_check
          %p348 = pneg %p94
        $region18: #{tpu_custom_call.1} parent=11 // pred_check_branch
          %350 = sbr.rel (%p348) target = $region20
        $region19: #{tpu_custom_call.1} parent=11 // pred_region
          %s352 = ssub.s32 16, 16
          %353 = vsyncadd [#allocation3], %s352
          %s355 = sshll.u32 [#allocation2], 4
          %s356 = int_to_ptr.vmem [resolvable:$true] %s355
          %358 = dma.hbm_to_vmem [thread:$0]  %s2, 16, %s356, [#allocation3]
        $region20: #{tpu_custom_call.1} parent=11 // pred_fallthru
          _
        // Predicated region
        $region21: #{tpu_custom_call.1} parent=11 // pred_check
          %p359 = pneg %p115
        $region22: #{tpu_custom_call.1} parent=11 // pred_check_branch
          %361 = sbr.rel (%p359) target = $region24
        $region23: #{tpu_custom_call.1} parent=11 // pred_region
          _
        $region24: #{tpu_custom_call.1} parent=11 // pred_fallthru
          _
        // Predicated region
        $region25: #{tpu_custom_call.1} parent=11 // pred_check
          %p362 = pneg %p136
        $region26: #{tpu_custom_call.1} parent=11 // pred_check_branch
          %364 = sbr.rel (%p362) target = $region28
        $region27: #{tpu_custom_call.1} parent=11 // pred_region
          %s366 = ssub.s32 16, 16
          %367 = vsyncadd [#allocation6], %s366
          %s369 = sshll.u32 [#allocation5], 4
          %s370 = int_to_ptr.vmem [resolvable:$true] %s369
          %372 = dma.hbm_to_vmem [thread:$0]  %s4, 16, %s370, [#allocation6]
        $region28: #{tpu_custom_call.1} parent=11 // pred_fallthru
          _
        // Predicated region
        $region29: #{tpu_custom_call.1} parent=11 // pred_check
          %p373 = pneg %p157
        $region30: #{tpu_custom_call.1} parent=11 // pred_check_branch
          %375 = sbr.rel (%p373) target = $region32
        $region31: #{tpu_custom_call.1} parent=11 // pred_region
          %s377 = ssub.s32 16, 16
          %378 = vsyncadd [#allocation6], %s377
          %s380 = sshll.u32 [#allocation7], 4
          %s381 = int_to_ptr.vmem [resolvable:$true] %s380
          %383 = dma.hbm_to_vmem [thread:$0]  %s5, 16, %s381, [#allocation6]
        $region32: #{tpu_custom_call.1} parent=11 // pred_fallthru
          _
        // Predicated region
        $region33: #{tpu_custom_call.1} parent=11 // pred_check
          %p384 = pneg %p178
        $region34: #{tpu_custom_call.1} parent=11 // pred_check_branch
          %386 = sbr.rel (%p384) target = $region36
        $region35: #{tpu_custom_call.1} parent=11 // pred_region
          %s388 = ssub.s32 16, 16
          %389 = vsyncadd [#allocation9], %s388
          %s391 = sshll.u32 [#allocation8], 4
          %s392 = int_to_ptr.vmem [resolvable:$true] %s391
          %394 = dma.hbm_to_vmem [thread:$0]  %s6, 16, %s392, [#allocation9]
        $region36: #{tpu_custom_call.1} parent=11 // pred_fallthru
          _
        // Predicated region
        $region37: #{tpu_custom_call.1} parent=11 // pred_check
          %p395 = pneg %p199
        $region38: #{tpu_custom_call.1} parent=11 // pred_check_branch
          %397 = sbr.rel (%p395) target = $region40
        $region39: #{tpu_custom_call.1} parent=11 // pred_region
          %s399 = ssub.s32 256, 256
          %400 = vsyncadd [#allocation9], %s399
          %s401 = sshll.u32 [#allocation10], 4
          %s402 = int_to_ptr.vmem [resolvable:$true] %s401
          %407 = dma.hbm_to_vmem [thread:$0]  %s7, 256, %s402, [#allocation9], 64, 64, 4
        $region40: #{tpu_custom_call.1} parent=11 // pred_fallthru
          _
        // Predicated region
        $region41: #{tpu_custom_call.1} parent=11 // pred_check
          %p408 = pneg %p220
        $region42: #{tpu_custom_call.1} parent=11 // pred_check_branch
          %410 = sbr.rel (%p408) target = $region44
        $region43: #{tpu_custom_call.1} parent=11 // pred_region
          %s412 = ssub.s32 16, 16
          %413 = vsyncadd [#allocation12], %s412
          %s415 = sshll.u32 [#allocation11], 4
          %s416 = int_to_ptr.vmem [resolvable:$true] %s415
          %418 = dma.hbm_to_vmem [thread:$0]  %s8, 16, %s416, [#allocation12]
        $region44: #{tpu_custom_call.1} parent=11 // pred_fallthru
          _
        // Predicated region
        $region45: #{tpu_custom_call.1} parent=11 // pred_check
          %p419 = pneg %p241
        $region46: #{tpu_custom_call.1} parent=11 // pred_check_branch
          %421 = sbr.rel (%p419) target = $region48
        $region47: #{tpu_custom_call.1} parent=11 // pred_region
          _
        $region48: #{tpu_custom_call.1} parent=11 // pred_fallthru
          _
        // Predicated region
        $region49: #{tpu_custom_call.1} parent=11 // pred_check
          %p422 = pneg %p262
        $region50: #{tpu_custom_call.1} parent=11 // pred_check_branch
          %424 = sbr.rel (%p422) target = $region52
        $region51: #{tpu_custom_call.1} parent=11 // pred_region
          _
        $region52: #{tpu_custom_call.1} parent=11 // pred_fallthru
          _
        // Predicated region
        $region53: #{tpu_custom_call.1} parent=11 // pred_check
          %p425 = pneg %p283
        $region54: #{tpu_custom_call.1} parent=11 // pred_check_branch
          %427 = sbr.rel (%p425) target = $region56
        $region55: #{tpu_custom_call.1} parent=11 // pred_region
          _
        $region56: #{tpu_custom_call.1} parent=11 // pred_fallthru
          _
        // Predicated region
        $region57: #{tpu_custom_call.1} parent=11 // pred_check
          %p428 = pneg %p304
        $region58: #{tpu_custom_call.1} parent=11 // pred_check_branch
          %430 = sbr.rel (%p428) target = $region60
        $region59: #{tpu_custom_call.1} parent=11 // pred_region
          _
        $region60: #{tpu_custom_call.1} parent=11 // pred_fallthru
          _
      $region12: #{tpu_custom_call.1} parent=5 // pred_fallthru
        _
      %p431 = scmp.lt.s32.totalorder %s26, 2
      // Predicated region
      $region61: #{tpu_custom_call.1} parent=5 // pred_check
        %p432 = pneg %p431
      $region62: #{tpu_custom_call.1} parent=5 // pred_check_branch
        %434 = sbr.rel (%p432) target = $region64
      $region63: #{tpu_custom_call.1} parent=5 // pred_region
        // Predicated region
        $region65: #{tpu_custom_call.1} parent=63 // pred_check
          %p435 = pneg %p46
        $region66: #{tpu_custom_call.1} parent=63 // pred_check_branch
          %437 = sbr.rel (%p435) target = $region68
        $region67: #{tpu_custom_call.1} parent=63 // pred_region
          %p438 = scmp.lt.s32.totalorder %s26, 1
          %s439 = scalar_select %p438, %s26, 1
          %s440 = smul.addr %s439, 8
          %s441 = scalar_lea.vmem %s0, %s440
        $region68: #{tpu_custom_call.1} parent=63 // pred_fallthru
          _
      $region64: #{tpu_custom_call.1} parent=5 // pred_fallthru
        _
      %p442 = scmp.le.s32.totalorder 1, %s26
      %p443 = scmp.lt.s32.totalorder %s26, 3
      %p444 = pnand %p442, %p443
      %p445 = pneg %p444
      // Predicated region
      $region69: #{tpu_custom_call.1} parent=5 // pred_check
        _
      $region70: #{tpu_custom_call.1} parent=5 // pred_check_branch
        %447 = sbr.rel (%p444) target = $region72
      $region71: #{tpu_custom_call.1} parent=5 // pred_region
        %s448 = ssub.s32 %s26, 1
        // Predicated region
        $region73: #{tpu_custom_call.1} parent=71 // pred_check
          %p449 = pneg %p94
        $region74: #{tpu_custom_call.1} parent=71 // pred_check_branch
          %451 = sbr.rel (%p449) target = $region76
        $region75: #{tpu_custom_call.1} parent=71 // pred_region
          %452 = dma.done [#allocation3], 16
        $region76: #{tpu_custom_call.1} parent=71 // pred_fallthru
          _
        // Predicated region
        $region77: #{tpu_custom_call.1} parent=71 // pred_check
          %p453 = pneg %p136
        $region78: #{tpu_custom_call.1} parent=71 // pred_check_branch
          %455 = sbr.rel (%p453) target = $region80
        $region79: #{tpu_custom_call.1} parent=71 // pred_region
          %456 = dma.done [#allocation6], 16
        $region80: #{tpu_custom_call.1} parent=71 // pred_fallthru
          _
        // Predicated region
        $region81: #{tpu_custom_call.1} parent=71 // pred_check
          %p457 = pneg %p157
        $region82: #{tpu_custom_call.1} parent=71 // pred_check_branch
          %459 = sbr.rel (%p457) target = $region84
        $region83: #{tpu_custom_call.1} parent=71 // pred_region
          %460 = dma.done [#allocation6], 16
        $region84: #{tpu_custom_call.1} parent=71 // pred_fallthru
          _
        // Predicated region
        $region85: #{tpu_custom_call.1} parent=71 // pred_check
          %p461 = pneg %p178
        $region86: #{tpu_custom_call.1} parent=71 // pred_check_branch
          %463 = sbr.rel (%p461) target = $region88
        $region87: #{tpu_custom_call.1} parent=71 // pred_region
          %464 = dma.done [#allocation9], 16
        $region88: #{tpu_custom_call.1} parent=71 // pred_fallthru
          _
        // Predicated region
        $region89: #{tpu_custom_call.1} parent=71 // pred_check
          %p465 = pneg %p199
        $region90: #{tpu_custom_call.1} parent=71 // pred_check_branch
          %467 = sbr.rel (%p465) target = $region92
        $region91: #{tpu_custom_call.1} parent=71 // pred_region
          %468 = dma.done [#allocation9], 256
        $region92: #{tpu_custom_call.1} parent=71 // pred_fallthru
          _
        // Predicated region
        $region93: #{tpu_custom_call.1} parent=71 // pred_check
          %p469 = pneg %p220
        $region94: #{tpu_custom_call.1} parent=71 // pred_check_branch
          %471 = sbr.rel (%p469) target = $region96
        $region95: #{tpu_custom_call.1} parent=71 // pred_region
          %472 = dma.done [#allocation12], 16
        $region96: #{tpu_custom_call.1} parent=71 // pred_fallthru
          _
        %p473 = scmp.lt.s32.totalorder %s31, 1
        %s474 = scalar_select %p473, %s31, 1
        %s475 = smul.addr %s474, 8
        %s476 = scalar_lea.vmem %s0, %s475
        %p477 = pneg %p52
        %p478 = pneg %p49
        %p479 = pneg %p73
        %p480 = pneg %p70
        %p481 = pneg %p94
        %p482 = pneg %p91
        %p483 = pneg %p115
        %p484 = pneg %p112
        %p485 = pneg %p136
        %p486 = pneg %p133
        %p487 = pneg %p157
        %p488 = pneg %p154
        %p489 = pneg %p178
        %p490 = pneg %p175
        %p491 = pneg %p199
        %p492 = pneg %p196
        %p493 = pneg %p220
        %p494 = pneg %p217
        %p495 = pneg %p241
        %p496 = pneg %p238
        %p497 = pneg %p262
        %p498 = pneg %p259
        %p499 = pneg %p283
        %p500 = pneg %p280
        %p501 = pneg %p304
        %p502 = pneg %p301
        %p503 = pneg %p330
        %p504 = pneg %p327
        %s505 = sand.u32 %s317, 1
        %s506 = scalar_lea.sflag [#allocation4], %s505
        %s507 = sand.u32 %s317, 1
        %s508 = smul.addr %s507, 8
        %s509 = scalar_lea.vmem [#allocation13], %s508
        %p510 = scmp.lt.s32.totalorder %s31, 1
        %s511 = scalar_select %p510, %s31, 1
        %s512 = smul.addr %s511, 8
        %s513 = scalar_lea.vmem %s0, %s512
        %v515 = vld [vmem:[%s513] sm:$0xff]
        %v516 = vpack.c.bf16 %v515, %v515
        %v517 = vld [vmem:[%s1] sm:$0xf]
        %v518 = vld [vmem:[%s1 + $0x4] sm:$0xf]
        %v519 = vld [vmem:[%s1 + $0x8] sm:$0xf]
        %v520 = vld [vmem:[%s1 + $0xc] sm:$0xf]
        %v521 = vld [vmem:[#allocation2] sm:$0x1]
        %v523 = vlaneseq
        %v524 = vshrl.u32 %v523, 7
        %v525 = vsub.s32 0, %v524
        %v526 = vrot.slane %v521, %v525
        %v532 = vunpack.c.l.b16 %v517
        %v533 = vunpack.c.l.b16 %v518
        %v534 = vunpack.c.l.b16 %v519
        %v535 = vunpack.c.l.b16 %v520
        %v536 = vpack.c.b16 %v533, %v532
        %v537 = vpack.c.b16 %v535, %v534
        %vm540 = vcmask 261120
        %v542 = vsel %vm540, %v516, 0
        %544 = vmatprep.subr.bf16.mxu0 0
        %545 = vmatpush1.bf16.msra.mxu0 0
        %546 = vmatprep.subr.bf16.mxu0 0
        %547 = vmatpush1.bf16.msra.mxu0 0
        %548 = vmatprep.subr.bf16.mxu0 0
        %549 = vmatpush1.bf16.msra.mxu0 0
        %550 = vmatprep.subr.bf16.mxu0 0
        %551 = vmatpush1.bf16.msra.mxu0 0
        %552 = vmatprep.subr.bf16.mxu0 0
        %553 = vmatpush1.bf16.msra.mxu0 0
        %554 = vmatprep.subr.bf16.mxu0 0
        %555 = vmatpush1.bf16.msra.mxu0 0
        %556 = vmatprep.subr.bf16.mxu0 0
        %557 = vmatpush1.bf16.msra.mxu0 %v537
        %558 = vmatprep.subr.bf16.mxu0 0
        %559 = vmatpush1.bf16.msra.mxu0 %v536
        %560 = vmatprep.subr.bf16.mxu0 0
        %561 = vmatpush2.bf16.msra.mxu0 0
        %562 = vmatprep.subr.bf16.mxu0 0
        %563 = vmatpush2.bf16.msra.mxu0 0
        %564 = vmatprep.subr.bf16.mxu0 0
        %565 = vmatpush2.bf16.msra.mxu0 0
        %566 = vmatprep.subr.bf16.mxu0 0
        %567 = vmatpush2.bf16.msra.mxu0 0
        %568 = vmatprep.subr.bf16.mxu0 0
        %569 = vmatpush2.bf16.msra.mxu0 0
        %570 = vmatprep.subr.bf16.mxu0 0
        %571 = vmatpush2.bf16.msra.mxu0 0
        %572 = vmatprep.subr.bf16.mxu0 0
        %573 = vmatpush2.bf16.msra.mxu0 0
        %574 = vmatprep.subr.bf16.mxu0 0
        %575 = vmatpush2.bf16.msra.mxu0 0
        %576 = vmatprep.mubr.bf16.mxu0 0
        %577 = vmatmul.mubr.bf16.gmra.mxu0 %v542
        %v578 = vpop.f32.mrf.mxu0
        %v579 = vadd.f32 %v526, %v578
        %v580 = vpop.f32.mrf.mxu0
        %v581 = vpop.f32.mrf.mxu0
        %v582 = vpop.f32.mrf.mxu0
        %583 = vdwg.mxu0
        %585 = vrot.lane.b32.xlu0 %v579, 124
        %v586 = vpop.permute.xlu0 %585
        %587 = vrot.lane.b32.xlu0 %v579, 120
        %v588 = vpop.permute.xlu0 %587
        %589 = vrot.lane.b32.xlu0 %v579, 116
        %v590 = vpop.permute.xlu0 %589
        %591 = vrot.lane.b32.xlu0 %v579, 112
        %v592 = vpop.permute.xlu0 %591
        %593 = vrot.lane.b32.xlu0 %v579, 108
        %v594 = vpop.permute.xlu0 %593
        %595 = vrot.lane.b32.xlu0 %v579, 104
        %v596 = vpop.permute.xlu0 %595
        %597 = vrot.lane.b32.xlu0 %v579, 100
        %v598 = vpop.permute.xlu0 %597
        %599 = vrot.lane.b32.xlu0 %v579, 96
        %v600 = vpop.permute.xlu0 %599
        %vm601 = vcmask 31744
        %v602 = vsel %vm601, %v579, 0
        %v604 = vsel %vm601, %v600, 0
        %606 = vmatprep.subr.mxu0 0.0
        %607 = vmatpush1.xpose.msra.mxu0 0.0
        %608 = vmatprep.subr.mxu0 0.0
        %609 = vmatpush1.xpose.msra.mxu0 0.0
        %610 = vmatprep.subr.mxu0 0.0
        %611 = vmatpush1.xpose.msra.mxu0 0.0
        %612 = vmatprep.subr.mxu0 0.0
        %613 = vmatpush1.xpose.msra.mxu0 0.0
        %614 = vmatprep.subr.mxu0 0.0
        %615 = vmatpush1.xpose.msra.mxu0 0.0
        %616 = vmatprep.subr.mxu0 0.0
        %617 = vmatpush1.xpose.msra.mxu0 0.0
        %618 = vmatprep.subr.mxu0 0.0
        %619 = vmatpush1.xpose.msra.mxu0 0.0
        %620 = vmatprep.subr.mxu0 0.0
        %621 = vmatpush1.xpose.msra.mxu0 0.0
        %622 = vmatprep.subr.mxu0 0.0
        %623 = vmatpush1.xpose.msra.mxu0 0.0
        %624 = vmatprep.subr.mxu0 0.0
        %625 = vmatpush1.xpose.msra.mxu0 0.0
        %626 = vmatprep.subr.mxu0 0.0
        %627 = vmatpush1.xpose.msra.mxu0 0.0
        %628 = vmatprep.subr.mxu0 0.0
        %629 = vmatpush1.xpose.msra.mxu0 0.0
        %630 = vmatprep.subr.mxu0 0.0
        %631 = vmatpush1.xpose.msra.mxu0 0.0
        %632 = vmatprep.subr.mxu0 0.0
        %633 = vmatpush1.xpose.msra.mxu0 0.0
        %634 = vmatprep.subr.mxu0 0.0
        %635 = vmatpush1.xpose.msra.mxu0 0.0
        %636 = vmatprep.subr.mxu0 0.0
        %637 = vmatpush1.xpose.msra.mxu0 %v604
        %638 = vmatprep.subr.mxu0 0.0
        %639 = vmatpush2.xpose.msra.mxu0 0.0
        %640 = vmatprep.subr.mxu0 0.0
        %641 = vmatpush2.xpose.msra.mxu0 0.0
        %642 = vmatprep.subr.mxu0 0.0
        %643 = vmatpush2.xpose.msra.mxu0 0.0
        %644 = vmatprep.subr.mxu0 0.0
        %645 = vmatpush2.xpose.msra.mxu0 0.0
        %646 = vmatprep.subr.mxu0 0.0
        %647 = vmatpush2.xpose.msra.mxu0 0.0
        %648 = vmatprep.subr.mxu0 0.0
        %649 = vmatpush2.xpose.msra.mxu0 0.0
        %650 = vmatprep.subr.mxu0 0.0
        %651 = vmatpush2.xpose.msra.mxu0 0.0
        %652 = vmatprep.subr.mxu0 0.0
        %653 = vmatpush2.xpose.msra.mxu0 0.0
        %654 = vmatprep.subr.mxu0 0.0
        %655 = vmatpush2.xpose.msra.mxu0 0.0
        %656 = vmatprep.subr.mxu0 0.0
        %657 = vmatpush2.xpose.msra.mxu0 0.0
        %658 = vmatprep.subr.mxu0 0.0
        %659 = vmatpush2.xpose.msra.mxu0 0.0
        %660 = vmatprep.subr.mxu0 0.0
        %661 = vmatpush2.xpose.msra.mxu0 0.0
        %662 = vmatprep.subr.mxu0 0.0
        %663 = vmatpush2.xpose.msra.mxu0 0.0
        %664 = vmatprep.subr.mxu0 0.0
        %665 = vmatpush2.xpose.msra.mxu0 0.0
        %666 = vmatprep.subr.mxu0 0.0
        %667 = vmatpush2.xpose.msra.mxu0 0.0
        %668 = vmatprep.subr.mxu0 0.0
        %669 = vmatpush2.xpose.msra.mxu0 0.0
        %670 = vmatprep.mubr.f32.mxu0 0.0
        %671 = vmatmul.mubr.f32.gmra.mxu0 %v602
        %v672 = vpop.f32.mrf.mxu0
        %v673 = vadd.f32 0.0, %v672
        %v674 = vpop.f32.mrf.mxu0
        %675 = vdwg.mxu0
        %676 = vrot.lane.b32.xlu0 %v586, 96
        %v677 = vpop.permute.xlu0 %676
        %v678 = vsel %vm601, %v586, 0
        %v680 = vsel %vm601, %v677, 0
        %682 = vmatprep.subr.mxu0 0.0
        %683 = vmatpush1.xpose.msra.mxu0 0.0
        %684 = vmatprep.subr.mxu0 0.0
        %685 = vmatpush1.xpose.msra.mxu0 0.0
        %686 = vmatprep.subr.mxu0 0.0
        %687 = vmatpush1.xpose.msra.mxu0 0.0
        %688 = vmatprep.subr.mxu0 0.0
        %689 = vmatpush1.xpose.msra.mxu0 0.0
        %690 = vmatprep.subr.mxu0 0.0
        %691 = vmatpush1.xpose.msra.mxu0 0.0
        %692 = vmatprep.subr.mxu0 0.0
        %693 = vmatpush1.xpose.msra.mxu0 0.0
        %694 = vmatprep.subr.mxu0 0.0
        %695 = vmatpush1.xpose.msra.mxu0 0.0
        %696 = vmatprep.subr.mxu0 0.0
        %697 = vmatpush1.xpose.msra.mxu0 0.0
        %698 = vmatprep.subr.mxu0 0.0
        %699 = vmatpush1.xpose.msra.mxu0 0.0
        %700 = vmatprep.subr.mxu0 0.0
        %701 = vmatpush1.xpose.msra.mxu0 0.0
        %702 = vmatprep.subr.mxu0 0.0
        %703 = vmatpush1.xpose.msra.mxu0 0.0
        %704 = vmatprep.subr.mxu0 0.0
        %705 = vmatpush1.xpose.msra.mxu0 0.0
        %706 = vmatprep.subr.mxu0 0.0
        %707 = vmatpush1.xpose.msra.mxu0 0.0
        %708 = vmatprep.subr.mxu0 0.0
        %709 = vmatpush1.xpose.msra.mxu0 0.0
        %710 = vmatprep.subr.mxu0 0.0
        %711 = vmatpush1.xpose.msra.mxu0 0.0
        %712 = vmatprep.subr.mxu0 0.0
        %713 = vmatpush1.xpose.msra.mxu0 %v680
        %714 = vmatprep.subr.mxu0 0.0
        %715 = vmatpush2.xpose.msra.mxu0 0.0
        %716 = vmatprep.subr.mxu0 0.0
        %717 = vmatpush2.xpose.msra.mxu0 0.0
        %718 = vmatprep.subr.mxu0 0.0
        %719 = vmatpush2.xpose.msra.mxu0 0.0
        %720 = vmatprep.subr.mxu0 0.0
        %721 = vmatpush2.xpose.msra.mxu0 0.0
        %722 = vmatprep.subr.mxu0 0.0
        %723 = vmatpush2.xpose.msra.mxu0 0.0
        %724 = vmatprep.subr.mxu0 0.0
        %725 = vmatpush2.xpose.msra.mxu0 0.0
        %726 = vmatprep.subr.mxu0 0.0
        %727 = vmatpush2.xpose.msra.mxu0 0.0
        %728 = vmatprep.subr.mxu0 0.0
        %729 = vmatpush2.xpose.msra.mxu0 0.0
        %730 = vmatprep.subr.mxu0 0.0
        %731 = vmatpush2.xpose.msra.mxu0 0.0
        %732 = vmatprep.subr.mxu0 0.0
        %733 = vmatpush2.xpose.msra.mxu0 0.0
        %734 = vmatprep.subr.mxu0 0.0
        %735 = vmatpush2.xpose.msra.mxu0 0.0
        %736 = vmatprep.subr.mxu0 0.0
        %737 = vmatpush2.xpose.msra.mxu0 0.0
        %738 = vmatprep.subr.mxu0 0.0
        %739 = vmatpush2.xpose.msra.mxu0 0.0
        %740 = vmatprep.subr.mxu0 0.0
        %741 = vmatpush2.xpose.msra.mxu0 0.0
        %742 = vmatprep.subr.mxu0 0.0
        %743 = vmatpush2.xpose.msra.mxu0 0.0
        %744 = vmatprep.subr.mxu0 0.0
        %745 = vmatpush2.xpose.msra.mxu0 0.0
        %746 = vmatprep.mubr.f32.mxu0 0.0
        %747 = vmatmul.mubr.f32.gmra.mxu0 %v678
        %v748 = vpop.f32.mrf.mxu0
        %v749 = vadd.f32 0.0, %v748
        %v750 = vpop.f32.mrf.mxu0
        %751 = vdwg.mxu0
        %752 = vrot.lane.b32.xlu0 %v588, 96
        %v753 = vpop.permute.xlu0 %752
        %v754 = vsel %vm601, %v588, 0
        %v756 = vsel %vm601, %v753, 0
        %758 = vmatprep.subr.mxu0 0.0
        %759 = vmatpush1.xpose.msra.mxu0 0.0
        %760 = vmatprep.subr.mxu0 0.0
        %761 = vmatpush1.xpose.msra.mxu0 0.0
        %762 = vmatprep.subr.mxu0 0.0
        %763 = vmatpush1.xpose.msra.mxu0 0.0
        %764 = vmatprep.subr.mxu0 0.0
        %765 = vmatpush1.xpose.msra.mxu0 0.0
        %766 = vmatprep.subr.mxu0 0.0
        %767 = vmatpush1.xpose.msra.mxu0 0.0
        %768 = vmatprep.subr.mxu0 0.0
        %769 = vmatpush1.xpose.msra.mxu0 0.0
        %770 = vmatprep.subr.mxu0 0.0
        %771 = vmatpush1.xpose.msra.mxu0 0.0
        %772 = vmatprep.subr.mxu0 0.0
        %773 = vmatpush1.xpose.msra.mxu0 0.0
        %774 = vmatprep.subr.mxu0 0.0
        %775 = vmatpush1.xpose.msra.mxu0 0.0
        %776 = vmatprep.subr.mxu0 0.0
        %777 = vmatpush1.xpose.msra.mxu0 0.0
        %778 = vmatprep.subr.mxu0 0.0
        %779 = vmatpush1.xpose.msra.mxu0 0.0
        %780 = vmatprep.subr.mxu0 0.0
        %781 = vmatpush1.xpose.msra.mxu0 0.0
        %782 = vmatprep.subr.mxu0 0.0
        %783 = vmatpush1.xpose.msra.mxu0 0.0
        %784 = vmatprep.subr.mxu0 0.0
        %785 = vmatpush1.xpose.msra.mxu0 0.0
        %786 = vmatprep.subr.mxu0 0.0
        %787 = vmatpush1.xpose.msra.mxu0 0.0
        %788 = vmatprep.subr.mxu0 0.0
        %789 = vmatpush1.xpose.msra.mxu0 %v756
        %790 = vmatprep.subr.mxu0 0.0
        %791 = vmatpush2.xpose.msra.mxu0 0.0
        %792 = vmatprep.subr.mxu0 0.0
        %793 = vmatpush2.xpose.msra.mxu0 0.0
        %794 = vmatprep.subr.mxu0 0.0
        %795 = vmatpush2.xpose.msra.mxu0 0.0
        %796 = vmatprep.subr.mxu0 0.0
        %797 = vmatpush2.xpose.msra.mxu0 0.0
        %798 = vmatprep.subr.mxu0 0.0
        %799 = vmatpush2.xpose.msra.mxu0 0.0
        %800 = vmatprep.subr.mxu0 0.0
        %801 = vmatpush2.xpose.msra.mxu0 0.0
        %802 = vmatprep.subr.mxu0 0.0
        %803 = vmatpush2.xpose.msra.mxu0 0.0
        %804 = vmatprep.subr.mxu0 0.0
        %805 = vmatpush2.xpose.msra.mxu0 0.0
        %806 = vmatprep.subr.mxu0 0.0
        %807 = vmatpush2.xpose.msra.mxu0 0.0
        %808 = vmatprep.subr.mxu0 0.0
        %809 = vmatpush2.xpose.msra.mxu0 0.0
        %810 = vmatprep.subr.mxu0 0.0
        %811 = vmatpush2.xpose.msra.mxu0 0.0
        %812 = vmatprep.subr.mxu0 0.0
        %813 = vmatpush2.xpose.msra.mxu0 0.0
        %814 = vmatprep.subr.mxu0 0.0
        %815 = vmatpush2.xpose.msra.mxu0 0.0
        %816 = vmatprep.subr.mxu0 0.0
        %817 = vmatpush2.xpose.msra.mxu0 0.0
        %818 = vmatprep.subr.mxu0 0.0
        %819 = vmatpush2.xpose.msra.mxu0 0.0
        %820 = vmatprep.subr.mxu0 0.0
        %821 = vmatpush2.xpose.msra.mxu0 0.0
        %822 = vmatprep.mubr.f32.mxu0 0.0
        %823 = vmatmul.mubr.f32.gmra.mxu0 %v754
        %v824 = vpop.f32.mrf.mxu0
        %v825 = vadd.f32 0.0, %v824
        %v826 = vpop.f32.mrf.mxu0
        %827 = vdwg.mxu0
        %828 = vrot.lane.b32.xlu0 %v590, 96
        %v829 = vpop.permute.xlu0 %828
        %v830 = vsel %vm601, %v590, 0
        %v832 = vsel %vm601, %v829, 0
        %834 = vmatprep.subr.mxu0 0.0
        %835 = vmatpush1.xpose.msra.mxu0 0.0
        %836 = vmatprep.subr.mxu0 0.0
        %837 = vmatpush1.xpose.msra.mxu0 0.0
        %838 = vmatprep.subr.mxu0 0.0
        %839 = vmatpush1.xpose.msra.mxu0 0.0
        %840 = vmatprep.subr.mxu0 0.0
        %841 = vmatpush1.xpose.msra.mxu0 0.0
        %842 = vmatprep.subr.mxu0 0.0
        %843 = vmatpush1.xpose.msra.mxu0 0.0
        %844 = vmatprep.subr.mxu0 0.0
        %845 = vmatpush1.xpose.msra.mxu0 0.0
        %846 = vmatprep.subr.mxu0 0.0
        %847 = vmatpush1.xpose.msra.mxu0 0.0
        %848 = vmatprep.subr.mxu0 0.0
        %849 = vmatpush1.xpose.msra.mxu0 0.0
        %850 = vmatprep.subr.mxu0 0.0
        %851 = vmatpush1.xpose.msra.mxu0 0.0
        %852 = vmatprep.subr.mxu0 0.0
        %853 = vmatpush1.xpose.msra.mxu0 0.0
        %854 = vmatprep.subr.mxu0 0.0
        %855 = vmatpush1.xpose.msra.mxu0 0.0
        %856 = vmatprep.subr.mxu0 0.0
        %857 = vmatpush1.xpose.msra.mxu0 0.0
        %858 = vmatprep.subr.mxu0 0.0
        %859 = vmatpush1.xpose.msra.mxu0 0.0
        %860 = vmatprep.subr.mxu0 0.0
        %861 = vmatpush1.xpose.msra.mxu0 0.0
        %862 = vmatprep.subr.mxu0 0.0
        %863 = vmatpush1.xpose.msra.mxu0 0.0
        %864 = vmatprep.subr.mxu0 0.0
        %865 = vmatpush1.xpose.msra.mxu0 %v832
        %866 = vmatprep.subr.mxu0 0.0
        %867 = vmatpush2.xpose.msra.mxu0 0.0
        %868 = vmatprep.subr.mxu0 0.0
        %869 = vmatpush2.xpose.msra.mxu0 0.0
        %870 = vmatprep.subr.mxu0 0.0
        %871 = vmatpush2.xpose.msra.mxu0 0.0
        %872 = vmatprep.subr.mxu0 0.0
        %873 = vmatpush2.xpose.msra.mxu0 0.0
        %874 = vmatprep.subr.mxu0 0.0
        %875 = vmatpush2.xpose.msra.mxu0 0.0
        %876 = vmatprep.subr.mxu0 0.0
        %877 = vmatpush2.xpose.msra.mxu0 0.0
        %878 = vmatprep.subr.mxu0 0.0
        %879 = vmatpush2.xpose.msra.mxu0 0.0
        %880 = vmatprep.subr.mxu0 0.0
        %881 = vmatpush2.xpose.msra.mxu0 0.0
        %882 = vmatprep.subr.mxu0 0.0
        %883 = vmatpush2.xpose.msra.mxu0 0.0
        %884 = vmatprep.subr.mxu0 0.0
        %885 = vmatpush2.xpose.msra.mxu0 0.0
        %886 = vmatprep.subr.mxu0 0.0
        %887 = vmatpush2.xpose.msra.mxu0 0.0
        %888 = vmatprep.subr.mxu0 0.0
        %889 = vmatpush2.xpose.msra.mxu0 0.0
        %890 = vmatprep.subr.mxu0 0.0
        %891 = vmatpush2.xpose.msra.mxu0 0.0
        %892 = vmatprep.subr.mxu0 0.0
        %893 = vmatpush2.xpose.msra.mxu0 0.0
        %894 = vmatprep.subr.mxu0 0.0
        %895 = vmatpush2.xpose.msra.mxu0 0.0
        %896 = vmatprep.subr.mxu0 0.0
        %897 = vmatpush2.xpose.msra.mxu0 0.0
        %898 = vmatprep.mubr.f32.mxu0 0.0
        %899 = vmatmul.mubr.f32.gmra.mxu0 %v830
        %v900 = vpop.f32.mrf.mxu0
        %v901 = vadd.f32 0.0, %v900
        %v902 = vpop.f32.mrf.mxu0
        %903 = vdwg.mxu0
        %904 = vrot.lane.b32.xlu0 %v592, 96
        %v905 = vpop.permute.xlu0 %904
        %v906 = vsel %vm601, %v592, 0
        %v908 = vsel %vm601, %v905, 0
        %910 = vmatprep.subr.mxu0 0.0
        %911 = vmatpush1.xpose.msra.mxu0 0.0
        %912 = vmatprep.subr.mxu0 0.0
        %913 = vmatpush1.xpose.msra.mxu0 0.0
        %914 = vmatprep.subr.mxu0 0.0
        %915 = vmatpush1.xpose.msra.mxu0 0.0
        %916 = vmatprep.subr.mxu0 0.0
        %917 = vmatpush1.xpose.msra.mxu0 0.0
        %918 = vmatprep.subr.mxu0 0.0
        %919 = vmatpush1.xpose.msra.mxu0 0.0
        %920 = vmatprep.subr.mxu0 0.0
        %921 = vmatpush1.xpose.msra.mxu0 0.0
        %922 = vmatprep.subr.mxu0 0.0
        %923 = vmatpush1.xpose.msra.mxu0 0.0
        %924 = vmatprep.subr.mxu0 0.0
        %925 = vmatpush1.xpose.msra.mxu0 0.0
        %926 = vmatprep.subr.mxu0 0.0
        %927 = vmatpush1.xpose.msra.mxu0 0.0
        %928 = vmatprep.subr.mxu0 0.0
        %929 = vmatpush1.xpose.msra.mxu0 0.0
        %930 = vmatprep.subr.mxu0 0.0
        %931 = vmatpush1.xpose.msra.mxu0 0.0
        %932 = vmatprep.subr.mxu0 0.0
        %933 = vmatpush1.xpose.msra.mxu0 0.0
        %934 = vmatprep.subr.mxu0 0.0
        %935 = vmatpush1.xpose.msra.mxu0 0.0
        %936 = vmatprep.subr.mxu0 0.0
        %937 = vmatpush1.xpose.msra.mxu0 0.0
        %938 = vmatprep.subr.mxu0 0.0
        %939 = vmatpush1.xpose.msra.mxu0 0.0
        %940 = vmatprep.subr.mxu0 0.0
        %941 = vmatpush1.xpose.msra.mxu0 %v908
        %942 = vmatprep.subr.mxu0 0.0
        %943 = vmatpush2.xpose.msra.mxu0 0.0
        %944 = vmatprep.subr.mxu0 0.0
        %945 = vmatpush2.xpose.msra.mxu0 0.0
        %946 = vmatprep.subr.mxu0 0.0
        %947 = vmatpush2.xpose.msra.mxu0 0.0
        %948 = vmatprep.subr.mxu0 0.0
        %949 = vmatpush2.xpose.msra.mxu0 0.0
        %950 = vmatprep.subr.mxu0 0.0
        %951 = vmatpush2.xpose.msra.mxu0 0.0
        %952 = vmatprep.subr.mxu0 0.0
        %953 = vmatpush2.xpose.msra.mxu0 0.0
        %954 = vmatprep.subr.mxu0 0.0
        %955 = vmatpush2.xpose.msra.mxu0 0.0
        %956 = vmatprep.subr.mxu0 0.0
        %957 = vmatpush2.xpose.msra.mxu0 0.0
        %958 = vmatprep.subr.mxu0 0.0
        %959 = vmatpush2.xpose.msra.mxu0 0.0
        %960 = vmatprep.subr.mxu0 0.0
        %961 = vmatpush2.xpose.msra.mxu0 0.0
        %962 = vmatprep.subr.mxu0 0.0
        %963 = vmatpush2.xpose.msra.mxu0 0.0
        %964 = vmatprep.subr.mxu0 0.0
        %965 = vmatpush2.xpose.msra.mxu0 0.0
        %966 = vmatprep.subr.mxu0 0.0
        %967 = vmatpush2.xpose.msra.mxu0 0.0
        %968 = vmatprep.subr.mxu0 0.0
        %969 = vmatpush2.xpose.msra.mxu0 0.0
        %970 = vmatprep.subr.mxu0 0.0
        %971 = vmatpush2.xpose.msra.mxu0 0.0
        %972 = vmatprep.subr.mxu0 0.0
        %973 = vmatpush2.xpose.msra.mxu0 0.0
        %974 = vmatprep.mubr.f32.mxu0 0.0
        %975 = vmatmul.mubr.f32.gmra.mxu0 %v906
        %v976 = vpop.f32.mrf.mxu0
        %v977 = vadd.f32 0.0, %v976
        %v978 = vpop.f32.mrf.mxu0
        %979 = vdwg.mxu0
        %980 = vrot.lane.b32.xlu0 %v594, 96
        %v981 = vpop.permute.xlu0 %980
        %v982 = vsel %vm601, %v594, 0
        %v984 = vsel %vm601, %v981, 0
        %986 = vmatprep.subr.mxu0 0.0
        %987 = vmatpush1.xpose.msra.mxu0 0.0
        %988 = vmatprep.subr.mxu0 0.0
        %989 = vmatpush1.xpose.msra.mxu0 0.0
        %990 = vmatprep.subr.mxu0 0.0
        %991 = vmatpush1.xpose.msra.mxu0 0.0
        %992 = vmatprep.subr.mxu0 0.0
        %993 = vmatpush1.xpose.msra.mxu0 0.0
        %994 = vmatprep.subr.mxu0 0.0
        %995 = vmatpush1.xpose.msra.mxu0 0.0
        %996 = vmatprep.subr.mxu0 0.0
        %997 = vmatpush1.xpose.msra.mxu0 0.0
        %998 = vmatprep.subr.mxu0 0.0
        %999 = vmatpush1.xpose.msra.mxu0 0.0
        %1000 = vmatprep.subr.mxu0 0.0
        %1001 = vmatpush1.xpose.msra.mxu0 0.0
        %1002 = vmatprep.subr.mxu0 0.0
        %1003 = vmatpush1.xpose.msra.mxu0 0.0
        %1004 = vmatprep.subr.mxu0 0.0
        %1005 = vmatpush1.xpose.msra.mxu0 0.0
        %1006 = vmatprep.subr.mxu0 0.0
        %1007 = vmatpush1.xpose.msra.mxu0 0.0
        %1008 = vmatprep.subr.mxu0 0.0
        %1009 = vmatpush1.xpose.msra.mxu0 0.0
        %1010 = vmatprep.subr.mxu0 0.0
        %1011 = vmatpush1.xpose.msra.mxu0 0.0
        %1012 = vmatprep.subr.mxu0 0.0
        %1013 = vmatpush1.xpose.msra.mxu0 0.0
        %1014 = vmatprep.subr.mxu0 0.0
        %1015 = vmatpush1.xpose.msra.mxu0 0.0
        %1016 = vmatprep.subr.mxu0 0.0
        %1017 = vmatpush1.xpose.msra.mxu0 %v984
        %1018 = vmatprep.subr.mxu0 0.0
        %1019 = vmatpush2.xpose.msra.mxu0 0.0
        %1020 = vmatprep.subr.mxu0 0.0
        %1021 = vmatpush2.xpose.msra.mxu0 0.0
        %1022 = vmatprep.subr.mxu0 0.0
        %1023 = vmatpush2.xpose.msra.mxu0 0.0
        %1024 = vmatprep.subr.mxu0 0.0
        %1025 = vmatpush2.xpose.msra.mxu0 0.0
        %1026 = vmatprep.subr.mxu0 0.0
        %1027 = vmatpush2.xpose.msra.mxu0 0.0
        %1028 = vmatprep.subr.mxu0 0.0
        %1029 = vmatpush2.xpose.msra.mxu0 0.0
        %1030 = vmatprep.subr.mxu0 0.0
        %1031 = vmatpush2.xpose.msra.mxu0 0.0
        %1032 = vmatprep.subr.mxu0 0.0
        %1033 = vmatpush2.xpose.msra.mxu0 0.0
        %1034 = vmatprep.subr.mxu0 0.0
        %1035 = vmatpush2.xpose.msra.mxu0 0.0
        %1036 = vmatprep.subr.mxu0 0.0
        %1037 = vmatpush2.xpose.msra.mxu0 0.0
        %1038 = vmatprep.subr.mxu0 0.0
        %1039 = vmatpush2.xpose.msra.mxu0 0.0
        %1040 = vmatprep.subr.mxu0 0.0
        %1041 = vmatpush2.xpose.msra.mxu0 0.0
        %1042 = vmatprep.subr.mxu0 0.0
        %1043 = vmatpush2.xpose.msra.mxu0 0.0
        %1044 = vmatprep.subr.mxu0 0.0
        %1045 = vmatpush2.xpose.msra.mxu0 0.0
        %1046 = vmatprep.subr.mxu0 0.0
        %1047 = vmatpush2.xpose.msra.mxu0 0.0
        %1048 = vmatprep.subr.mxu0 0.0
        %1049 = vmatpush2.xpose.msra.mxu0 0.0
        %1050 = vmatprep.mubr.f32.mxu0 0.0
        %1051 = vmatmul.mubr.f32.gmra.mxu0 %v982
        %v1052 = vpop.f32.mrf.mxu0
        %v1053 = vadd.f32 0.0, %v1052
        %v1054 = vpop.f32.mrf.mxu0
        %1055 = vdwg.mxu0
        %1056 = vrot.lane.b32.xlu0 %v596, 96
        %v1057 = vpop.permute.xlu0 %1056
        %v1058 = vsel %vm601, %v596, 0
        %v1060 = vsel %vm601, %v1057, 0
        %1062 = vmatprep.subr.mxu0 0.0
        %1063 = vmatpush1.xpose.msra.mxu0 0.0
        %1064 = vmatprep.subr.mxu0 0.0
        %1065 = vmatpush1.xpose.msra.mxu0 0.0
        %1066 = vmatprep.subr.mxu0 0.0
        %1067 = vmatpush1.xpose.msra.mxu0 0.0
        %1068 = vmatprep.subr.mxu0 0.0
        %1069 = vmatpush1.xpose.msra.mxu0 0.0
        %1070 = vmatprep.subr.mxu0 0.0
        %1071 = vmatpush1.xpose.msra.mxu0 0.0
        %1072 = vmatprep.subr.mxu0 0.0
        %1073 = vmatpush1.xpose.msra.mxu0 0.0
        %1074 = vmatprep.subr.mxu0 0.0
        %1075 = vmatpush1.xpose.msra.mxu0 0.0
        %1076 = vmatprep.subr.mxu0 0.0
        %1077 = vmatpush1.xpose.msra.mxu0 0.0
        %1078 = vmatprep.subr.mxu0 0.0
        %1079 = vmatpush1.xpose.msra.mxu0 0.0
        %1080 = vmatprep.subr.mxu0 0.0
        %1081 = vmatpush1.xpose.msra.mxu0 0.0
        %1082 = vmatprep.subr.mxu0 0.0
        %1083 = vmatpush1.xpose.msra.mxu0 0.0
        %1084 = vmatprep.subr.mxu0 0.0
        %1085 = vmatpush1.xpose.msra.mxu0 0.0
        %1086 = vmatprep.subr.mxu0 0.0
        %1087 = vmatpush1.xpose.msra.mxu0 0.0
        %1088 = vmatprep.subr.mxu0 0.0
        %1089 = vmatpush1.xpose.msra.mxu0 0.0
        %1090 = vmatprep.subr.mxu0 0.0
        %1091 = vmatpush1.xpose.msra.mxu0 0.0
        %1092 = vmatprep.subr.mxu0 0.0
        %1093 = vmatpush1.xpose.msra.mxu0 %v1060
        %1094 = vmatprep.subr.mxu0 0.0
        %1095 = vmatpush2.xpose.msra.mxu0 0.0
        %1096 = vmatprep.subr.mxu0 0.0
        %1097 = vmatpush2.xpose.msra.mxu0 0.0
        %1098 = vmatprep.subr.mxu0 0.0
        %1099 = vmatpush2.xpose.msra.mxu0 0.0
        %1100 = vmatprep.subr.mxu0 0.0
        %1101 = vmatpush2.xpose.msra.mxu0 0.0
        %1102 = vmatprep.subr.mxu0 0.0
        %1103 = vmatpush2.xpose.msra.mxu0 0.0
        %1104 = vmatprep.subr.mxu0 0.0
        %1105 = vmatpush2.xpose.msra.mxu0 0.0
        %1106 = vmatprep.subr.mxu0 0.0
        %1107 = vmatpush2.xpose.msra.mxu0 0.0
        %1108 = vmatprep.subr.mxu0 0.0
        %1109 = vmatpush2.xpose.msra.mxu0 0.0
        %1110 = vmatprep.subr.mxu0 0.0
        %1111 = vmatpush2.xpose.msra.mxu0 0.0
        %1112 = vmatprep.subr.mxu0 0.0
        %1113 = vmatpush2.xpose.msra.mxu0 0.0
        %1114 = vmatprep.subr.mxu0 0.0
        %1115 = vmatpush2.xpose.msra.mxu0 0.0
        %1116 = vmatprep.subr.mxu0 0.0
        %1117 = vmatpush2.xpose.msra.mxu0 0.0
        %1118 = vmatprep.subr.mxu0 0.0
        %1119 = vmatpush2.xpose.msra.mxu0 0.0
        %1120 = vmatprep.subr.mxu0 0.0
        %1121 = vmatpush2.xpose.msra.mxu0 0.0
        %1122 = vmatprep.subr.mxu0 0.0
        %1123 = vmatpush2.xpose.msra.mxu0 0.0
        %1124 = vmatprep.subr.mxu0 0.0
        %1125 = vmatpush2.xpose.msra.mxu0 0.0
        %1126 = vmatprep.mubr.f32.mxu0 0.0
        %1127 = vmatmul.mubr.f32.gmra.mxu0 %v1058
        %v1128 = vpop.f32.mrf.mxu0
        %v1129 = vadd.f32 0.0, %v1128
        %v1130 = vpop.f32.mrf.mxu0
        %1131 = vdwg.mxu0
        %1132 = vrot.lane.b32.xlu0 %v598, 96
        %v1133 = vpop.permute.xlu0 %1132
        %v1134 = vsel %vm601, %v598, 0
        %v1136 = vsel %vm601, %v1133, 0
        %1138 = vmatprep.subr.mxu0 0.0
        %1139 = vmatpush1.xpose.msra.mxu0 0.0
        %1140 = vmatprep.subr.mxu0 0.0
        %1141 = vmatpush1.xpose.msra.mxu0 0.0
        %1142 = vmatprep.subr.mxu0 0.0
        %1143 = vmatpush1.xpose.msra.mxu0 0.0
        %1144 = vmatprep.subr.mxu0 0.0
        %1145 = vmatpush1.xpose.msra.mxu0 0.0
        %1146 = vmatprep.subr.mxu0 0.0
        %1147 = vmatpush1.xpose.msra.mxu0 0.0
        %1148 = vmatprep.subr.mxu0 0.0
        %1149 = vmatpush1.xpose.msra.mxu0 0.0
        %1150 = vmatprep.subr.mxu0 0.0
        %1151 = vmatpush1.xpose.msra.mxu0 0.0
        %1152 = vmatprep.subr.mxu0 0.0
        %1153 = vmatpush1.xpose.msra.mxu0 0.0
        %1154 = vmatprep.subr.mxu0 0.0
        %1155 = vmatpush1.xpose.msra.mxu0 0.0
        %1156 = vmatprep.subr.mxu0 0.0
        %1157 = vmatpush1.xpose.msra.mxu0 0.0
        %1158 = vmatprep.subr.mxu0 0.0
        %1159 = vmatpush1.xpose.msra.mxu0 0.0
        %1160 = vmatprep.subr.mxu0 0.0
        %1161 = vmatpush1.xpose.msra.mxu0 0.0
        %1162 = vmatprep.subr.mxu0 0.0
        %1163 = vmatpush1.xpose.msra.mxu0 0.0
        %1164 = vmatprep.subr.mxu0 0.0
        %1165 = vmatpush1.xpose.msra.mxu0 0.0
        %1166 = vmatprep.subr.mxu0 0.0
        %1167 = vmatpush1.xpose.msra.mxu0 0.0
        %1168 = vmatprep.subr.mxu0 0.0
        %1169 = vmatpush1.xpose.msra.mxu0 %v1136
        %1170 = vmatprep.subr.mxu0 0.0
        %1171 = vmatpush2.xpose.msra.mxu0 0.0
        %1172 = vmatprep.subr.mxu0 0.0
        %1173 = vmatpush2.xpose.msra.mxu0 0.0
        %1174 = vmatprep.subr.mxu0 0.0
        %1175 = vmatpush2.xpose.msra.mxu0 0.0
        %1176 = vmatprep.subr.mxu0 0.0
        %1177 = vmatpush2.xpose.msra.mxu0 0.0
        %1178 = vmatprep.subr.mxu0 0.0
        %1179 = vmatpush2.xpose.msra.mxu0 0.0
        %1180 = vmatprep.subr.mxu0 0.0
        %1181 = vmatpush2.xpose.msra.mxu0 0.0
        %1182 = vmatprep.subr.mxu0 0.0
        %1183 = vmatpush2.xpose.msra.mxu0 0.0
        %1184 = vmatprep.subr.mxu0 0.0
        %1185 = vmatpush2.xpose.msra.mxu0 0.0
        %1186 = vmatprep.subr.mxu0 0.0
        %1187 = vmatpush2.xpose.msra.mxu0 0.0
        %1188 = vmatprep.subr.mxu0 0.0
        %1189 = vmatpush2.xpose.msra.mxu0 0.0
        %1190 = vmatprep.subr.mxu0 0.0
        %1191 = vmatpush2.xpose.msra.mxu0 0.0
        %1192 = vmatprep.subr.mxu0 0.0
        %1193 = vmatpush2.xpose.msra.mxu0 0.0
        %1194 = vmatprep.subr.mxu0 0.0
        %1195 = vmatpush2.xpose.msra.mxu0 0.0
        %1196 = vmatprep.subr.mxu0 0.0
        %1197 = vmatpush2.xpose.msra.mxu0 0.0
        %1198 = vmatprep.subr.mxu0 0.0
        %1199 = vmatpush2.xpose.msra.mxu0 0.0
        %1200 = vmatprep.subr.mxu0 0.0
        %1201 = vmatpush2.xpose.msra.mxu0 0.0
        %1202 = vmatprep.mubr.f32.mxu0 0.0
        %1203 = vmatmul.mubr.f32.gmra.mxu0 %v1134
        %v1204 = vpop.f32.mrf.mxu0
        %v1205 = vadd.f32 0.0, %v1204
        %v1206 = vpop.f32.mrf.mxu0
        %1207 = vdwg.mxu0
        %vm1208 = vcmask 64512
        %v1209 = vsel %vm1208, %v673, -inf
        %1210 = vmax.xlane.f32.xlu0 %v1209
        %v1211 = vpop.xlane.xlu0 %1210
        %v1212 = vsel %vm1208, %v749, -inf
        %1213 = vmax.xlane.f32.xlu0 %v1212
        %v1214 = vpop.xlane.xlu0 %1213
        %v1215 = vsel %vm1208, %v825, -inf
        %1216 = vmax.xlane.f32.xlu0 %v1215
        %v1217 = vpop.xlane.xlu0 %1216
        %v1218 = vsel %vm1208, %v901, -inf
        %1219 = vmax.xlane.f32.xlu0 %v1218
        %v1220 = vpop.xlane.xlu0 %1219
        %v1221 = vsel %vm1208, %v977, -inf
        %1222 = vmax.xlane.f32.xlu0 %v1221
        %v1223 = vpop.xlane.xlu0 %1222
        %v1224 = vsel %vm1208, %v1053, -inf
        %1225 = vmax.xlane.f32.xlu0 %v1224
        %v1226 = vpop.xlane.xlu0 %1225
        %v1227 = vsel %vm1208, %v1129, -inf
        %1228 = vmax.xlane.f32.xlu0 %v1227
        %v1229 = vpop.xlane.xlu0 %1228
        %v1230 = vsel %vm1208, %v1205, -inf
        %1231 = vmax.xlane.f32.xlu0 %v1230
        %v1232 = vpop.xlane.xlu0 %1231
        %v1233 = vsub.f32 %v673, %v1211
        %v1234 = vsub.f32 %v749, %v1214
        %v1235 = vsub.f32 %v825, %v1217
        %v1236 = vsub.f32 %v901, %v1220
        %v1237 = vsub.f32 %v977, %v1223
        %v1238 = vsub.f32 %v1053, %v1226
        %v1239 = vsub.f32 %v1129, %v1229
        %v1240 = vsub.f32 %v1205, %v1232
        %v1241 = vmul.f32 %v1233, 1.442695
        %v1242 = vpow.pop %v1241
        %v1243 = vmul.f32 %v1234, 1.442695
        %v1244 = vpow.pop %v1243
        %v1245 = vmul.f32 %v1235, 1.442695
        %v1246 = vpow.pop %v1245
        %v1247 = vmul.f32 %v1236, 1.442695
        %v1248 = vpow.pop %v1247
        %v1249 = vmul.f32 %v1237, 1.442695
        %v1250 = vpow.pop %v1249
        %v1251 = vmul.f32 %v1238, 1.442695
        %v1252 = vpow.pop %v1251
        %v1253 = vmul.f32 %v1239, 1.442695
        %v1254 = vpow.pop %v1253
        %v1255 = vmul.f32 %v1240, 1.442695
        %v1256 = vpow.pop %v1255
        %v1257 = vsel %vm1208, %v1242, 0.0
        %1258 = vadd.xlane.f32.xlu0 %v1257
        %v1259 = vpop.xlane.xlu0 %1258
        %v1260 = vsel %vm1208, %v1244, 0.0
        %1261 = vadd.xlane.f32.xlu0 %v1260
        %v1262 = vpop.xlane.xlu0 %1261
        %v1263 = vsel %vm1208, %v1246, 0.0
        %1264 = vadd.xlane.f32.xlu0 %v1263
        %v1265 = vpop.xlane.xlu0 %1264
        %v1266 = vsel %vm1208, %v1248, 0.0
        %1267 = vadd.xlane.f32.xlu0 %v1266
        %v1268 = vpop.xlane.xlu0 %1267
        %v1269 = vsel %vm1208, %v1250, 0.0
        %1270 = vadd.xlane.f32.xlu0 %v1269
        %v1271 = vpop.xlane.xlu0 %1270
        %v1272 = vsel %vm1208, %v1252, 0.0
        %1273 = vadd.xlane.f32.xlu0 %v1272
        %v1274 = vpop.xlane.xlu0 %1273
        %v1275 = vsel %vm1208, %v1254, 0.0
        %1276 = vadd.xlane.f32.xlu0 %v1275
        %v1277 = vpop.xlane.xlu0 %1276
        %v1278 = vsel %vm1208, %v1256, 0.0
        %1279 = vadd.xlane.f32.xlu0 %v1278
        %v1280 = vpop.xlane.xlu0 %1279
        %v1281 = vrcp.pop %v1259
        %v1282 = vrcp.pop %v1262
        %v1283 = vrcp.pop %v1265
        %v1284 = vrcp.pop %v1268
        %v1285 = vrcp.pop %v1271
        %v1286 = vrcp.pop %v1274
        %v1287 = vrcp.pop %v1277
        %v1288 = vrcp.pop %v1280
        %v1289 = vmul.f32 %v1242, %v1281
        %v1290 = vmul.f32 %v1244, %v1282
        %v1291 = vmul.f32 %v1246, %v1283
        %v1292 = vmul.f32 %v1248, %v1284
        %v1293 = vmul.f32 %v1250, %v1285
        %v1294 = vmul.f32 %v1252, %v1286
        %v1295 = vmul.f32 %v1254, %v1287
        %v1296 = vmul.f32 %v1256, %v1288
        %1297 = vrot.lane.b32.xlu0 %v579, 64
        %v1298 = vpop.permute.xlu0 %1297
        %v1301 = vsel %vm1208, %v1289, 0
        %1303 = vmatprep.subr.mxu0 0.0
        %1304 = vmatpush1.msra.mxu0 0.0
        %1305 = vmatprep.subr.mxu0 0.0
        %1306 = vmatpush1.msra.mxu0 0.0
        %1307 = vmatprep.subr.mxu0 0.0
        %1308 = vmatpush1.msra.mxu0 0.0
        %1309 = vmatprep.subr.mxu0 0.0
        %1310 = vmatpush1.msra.mxu0 0.0
        %1311 = vmatprep.subr.mxu0 0.0
        %1312 = vmatpush1.msra.mxu0 0.0
        %1313 = vmatprep.subr.mxu0 0.0
        %1314 = vmatpush1.msra.mxu0 0.0
        %1315 = vmatprep.subr.mxu0 0.0
        %1316 = vmatpush1.msra.mxu0 0.0
        %1317 = vmatprep.subr.mxu0 0.0
        %1318 = vmatpush1.msra.mxu0 0.0
        %1319 = vmatprep.subr.mxu0 0.0
        %1320 = vmatpush1.msra.mxu0 0.0
        %1321 = vmatprep.subr.mxu0 0.0
        %1322 = vmatpush1.msra.mxu0 0.0
        %1323 = vmatprep.subr.mxu0 0.0
        %1324 = vmatpush1.msra.mxu0 0.0
        %1325 = vmatprep.subr.mxu0 0.0
        %1326 = vmatpush1.msra.mxu0 0.0
        %1327 = vmatprep.subr.mxu0 0.0
        %1328 = vmatpush1.msra.mxu0 0.0
        %1329 = vmatprep.subr.mxu0 0.0
        %1330 = vmatpush1.msra.mxu0 0.0
        %1331 = vmatprep.subr.mxu0 0.0
        %1332 = vmatpush1.msra.mxu0 0.0
        %1333 = vmatprep.subr.mxu0 0.0
        %1334 = vmatpush1.msra.mxu0 %v1298
        %1335 = vmatprep.subr.mxu0 0.0
        %1336 = vmatpush2.msra.mxu0 0.0
        %1337 = vmatprep.subr.mxu0 0.0
        %1338 = vmatpush2.msra.mxu0 0.0
        %1339 = vmatprep.subr.mxu0 0.0
        %1340 = vmatpush2.msra.mxu0 0.0
        %1341 = vmatprep.subr.mxu0 0.0
        %1342 = vmatpush2.msra.mxu0 0.0
        %1343 = vmatprep.subr.mxu0 0.0
        %1344 = vmatpush2.msra.mxu0 0.0
        %1345 = vmatprep.subr.mxu0 0.0
        %1346 = vmatpush2.msra.mxu0 0.0
        %1347 = vmatprep.subr.mxu0 0.0
        %1348 = vmatpush2.msra.mxu0 0.0
        %1349 = vmatprep.subr.mxu0 0.0
        %1350 = vmatpush2.msra.mxu0 0.0
        %1351 = vmatprep.subr.mxu0 0.0
        %1352 = vmatpush2.msra.mxu0 0.0
        %1353 = vmatprep.subr.mxu0 0.0
        %1354 = vmatpush2.msra.mxu0 0.0
        %1355 = vmatprep.subr.mxu0 0.0
        %1356 = vmatpush2.msra.mxu0 0.0
        %1357 = vmatprep.subr.mxu0 0.0
        %1358 = vmatpush2.msra.mxu0 0.0
        %1359 = vmatprep.subr.mxu0 0.0
        %1360 = vmatpush2.msra.mxu0 0.0
        %1361 = vmatprep.subr.mxu0 0.0
        %1362 = vmatpush2.msra.mxu0 0.0
        %1363 = vmatprep.subr.mxu0 0.0
        %1364 = vmatpush2.msra.mxu0 0.0
        %1365 = vmatprep.subr.mxu0 0.0
        %1366 = vmatpush2.msra.mxu0 0.0
        %1367 = vmatprep.mubr.f32.mxu0 0.0
        %1368 = vmatmul.mubr.f32.gmra.mxu0 %v1301
        %v1369 = vpop.f32.mrf.mxu0
        %v1370 = vadd.f32 0.0, %v1369
        %v1371 = vpop.f32.mrf.mxu0
        %1372 = vdwg.mxu0
        %1373 = vrot.lane.b32.xlu0 %v586, 64
        %v1374 = vpop.permute.xlu0 %1373
        %v1377 = vsel %vm1208, %v1290, 0
        %1379 = vmatprep.subr.mxu0 0.0
        %1380 = vmatpush1.msra.mxu0 0.0
        %1381 = vmatprep.subr.mxu0 0.0
        %1382 = vmatpush1.msra.mxu0 0.0
        %1383 = vmatprep.subr.mxu0 0.0
        %1384 = vmatpush1.msra.mxu0 0.0
        %1385 = vmatprep.subr.mxu0 0.0
        %1386 = vmatpush1.msra.mxu0 0.0
        %1387 = vmatprep.subr.mxu0 0.0
        %1388 = vmatpush1.msra.mxu0 0.0
        %1389 = vmatprep.subr.mxu0 0.0
        %1390 = vmatpush1.msra.mxu0 0.0
        %1391 = vmatprep.subr.mxu0 0.0
        %1392 = vmatpush1.msra.mxu0 0.0
        %1393 = vmatprep.subr.mxu0 0.0
        %1394 = vmatpush1.msra.mxu0 0.0
        %1395 = vmatprep.subr.mxu0 0.0
        %1396 = vmatpush1.msra.mxu0 0.0
        %1397 = vmatprep.subr.mxu0 0.0
        %1398 = vmatpush1.msra.mxu0 0.0
        %1399 = vmatprep.subr.mxu0 0.0
        %1400 = vmatpush1.msra.mxu0 0.0
        %1401 = vmatprep.subr.mxu0 0.0
        %1402 = vmatpush1.msra.mxu0 0.0
        %1403 = vmatprep.subr.mxu0 0.0
        %1404 = vmatpush1.msra.mxu0 0.0
        %1405 = vmatprep.subr.mxu0 0.0
        %1406 = vmatpush1.msra.mxu0 0.0
        %1407 = vmatprep.subr.mxu0 0.0
        %1408 = vmatpush1.msra.mxu0 0.0
        %1409 = vmatprep.subr.mxu0 0.0
        %1410 = vmatpush1.msra.mxu0 %v1374
        %1411 = vmatprep.subr.mxu0 0.0
        %1412 = vmatpush2.msra.mxu0 0.0
        %1413 = vmatprep.subr.mxu0 0.0
        %1414 = vmatpush2.msra.mxu0 0.0
        %1415 = vmatprep.subr.mxu0 0.0
        %1416 = vmatpush2.msra.mxu0 0.0
        %1417 = vmatprep.subr.mxu0 0.0
        %1418 = vmatpush2.msra.mxu0 0.0
        %1419 = vmatprep.subr.mxu0 0.0
        %1420 = vmatpush2.msra.mxu0 0.0
        %1421 = vmatprep.subr.mxu0 0.0
        %1422 = vmatpush2.msra.mxu0 0.0
        %1423 = vmatprep.subr.mxu0 0.0
        %1424 = vmatpush2.msra.mxu0 0.0
        %1425 = vmatprep.subr.mxu0 0.0
        %1426 = vmatpush2.msra.mxu0 0.0
        %1427 = vmatprep.subr.mxu0 0.0
        %1428 = vmatpush2.msra.mxu0 0.0
        %1429 = vmatprep.subr.mxu0 0.0
        %1430 = vmatpush2.msra.mxu0 0.0
        %1431 = vmatprep.subr.mxu0 0.0
        %1432 = vmatpush2.msra.mxu0 0.0
        %1433 = vmatprep.subr.mxu0 0.0
        %1434 = vmatpush2.msra.mxu0 0.0
        %1435 = vmatprep.subr.mxu0 0.0
        %1436 = vmatpush2.msra.mxu0 0.0
        %1437 = vmatprep.subr.mxu0 0.0
        %1438 = vmatpush2.msra.mxu0 0.0
        %1439 = vmatprep.subr.mxu0 0.0
        %1440 = vmatpush2.msra.mxu0 0.0
        %1441 = vmatprep.subr.mxu0 0.0
        %1442 = vmatpush2.msra.mxu0 0.0
        %1443 = vmatprep.mubr.f32.mxu0 0.0
        %1444 = vmatmul.mubr.f32.gmra.mxu0 %v1377
        %v1445 = vpop.f32.mrf.mxu0
        %v1446 = vadd.f32 0.0, %v1445
        %v1447 = vpop.f32.mrf.mxu0
        %1448 = vdwg.mxu0
        %1449 = vrot.lane.b32.xlu0 %v588, 64
        %v1450 = vpop.permute.xlu0 %1449
        %v1453 = vsel %vm1208, %v1291, 0
        %1455 = vmatprep.subr.mxu0 0.0
        %1456 = vmatpush1.msra.mxu0 0.0
        %1457 = vmatprep.subr.mxu0 0.0
        %1458 = vmatpush1.msra.mxu0 0.0
        %1459 = vmatprep.subr.mxu0 0.0
        %1460 = vmatpush1.msra.mxu0 0.0
        %1461 = vmatprep.subr.mxu0 0.0
        %1462 = vmatpush1.msra.mxu0 0.0
        %1463 = vmatprep.subr.mxu0 0.0
        %1464 = vmatpush1.msra.mxu0 0.0
        %1465 = vmatprep.subr.mxu0 0.0
        %1466 = vmatpush1.msra.mxu0 0.0
        %1467 = vmatprep.subr.mxu0 0.0
        %1468 = vmatpush1.msra.mxu0 0.0
        %1469 = vmatprep.subr.mxu0 0.0
        %1470 = vmatpush1.msra.mxu0 0.0
        %1471 = vmatprep.subr.mxu0 0.0
        %1472 = vmatpush1.msra.mxu0 0.0
        %1473 = vmatprep.subr.mxu0 0.0
        %1474 = vmatpush1.msra.mxu0 0.0
        %1475 = vmatprep.subr.mxu0 0.0
        %1476 = vmatpush1.msra.mxu0 0.0
        %1477 = vmatprep.subr.mxu0 0.0
        %1478 = vmatpush1.msra.mxu0 0.0
        %1479 = vmatprep.subr.mxu0 0.0
        %1480 = vmatpush1.msra.mxu0 0.0
        %1481 = vmatprep.subr.mxu0 0.0
        %1482 = vmatpush1.msra.mxu0 0.0
        %1483 = vmatprep.subr.mxu0 0.0
        %1484 = vmatpush1.msra.mxu0 0.0
        %1485 = vmatprep.subr.mxu0 0.0
        %1486 = vmatpush1.msra.mxu0 %v1450
        %1487 = vmatprep.subr.mxu0 0.0
        %1488 = vmatpush2.msra.mxu0 0.0
        %1489 = vmatprep.subr.mxu0 0.0
        %1490 = vmatpush2.msra.mxu0 0.0
        %1491 = vmatprep.subr.mxu0 0.0
        %1492 = vmatpush2.msra.mxu0 0.0
        %1493 = vmatprep.subr.mxu0 0.0
        %1494 = vmatpush2.msra.mxu0 0.0
        %1495 = vmatprep.subr.mxu0 0.0
        %1496 = vmatpush2.msra.mxu0 0.0
        %1497 = vmatprep.subr.mxu0 0.0
        %1498 = vmatpush2.msra.mxu0 0.0
        %1499 = vmatprep.subr.mxu0 0.0
        %1500 = vmatpush2.msra.mxu0 0.0
        %1501 = vmatprep.subr.mxu0 0.0
        %1502 = vmatpush2.msra.mxu0 0.0
        %1503 = vmatprep.subr.mxu0 0.0
        %1504 = vmatpush2.msra.mxu0 0.0
        %1505 = vmatprep.subr.mxu0 0.0
        %1506 = vmatpush2.msra.mxu0 0.0
        %1507 = vmatprep.subr.mxu0 0.0
        %1508 = vmatpush2.msra.mxu0 0.0
        %1509 = vmatprep.subr.mxu0 0.0
        %1510 = vmatpush2.msra.mxu0 0.0
        %1511 = vmatprep.subr.mxu0 0.0
        %1512 = vmatpush2.msra.mxu0 0.0
        %1513 = vmatprep.subr.mxu0 0.0
        %1514 = vmatpush2.msra.mxu0 0.0
        %1515 = vmatprep.subr.mxu0 0.0
        %1516 = vmatpush2.msra.mxu0 0.0
        %1517 = vmatprep.subr.mxu0 0.0
        %1518 = vmatpush2.msra.mxu0 0.0
        %1519 = vmatprep.mubr.f32.mxu0 0.0
        %1520 = vmatmul.mubr.f32.gmra.mxu0 %v1453
        %v1521 = vpop.f32.mrf.mxu0
        %v1522 = vadd.f32 0.0, %v1521
        %v1523 = vpop.f32.mrf.mxu0
        %1524 = vdwg.mxu0
        %1525 = vrot.lane.b32.xlu0 %v590, 64
        %v1526 = vpop.permute.xlu0 %1525
        %v1529 = vsel %vm1208, %v1292, 0
        %1531 = vmatprep.subr.mxu0 0.0
        %1532 = vmatpush1.msra.mxu0 0.0
        %1533 = vmatprep.subr.mxu0 0.0
        %1534 = vmatpush1.msra.mxu0 0.0
        %1535 = vmatprep.subr.mxu0 0.0
        %1536 = vmatpush1.msra.mxu0 0.0
        %1537 = vmatprep.subr.mxu0 0.0
        %1538 = vmatpush1.msra.mxu0 0.0
        %1539 = vmatprep.subr.mxu0 0.0
        %1540 = vmatpush1.msra.mxu0 0.0
        %1541 = vmatprep.subr.mxu0 0.0
        %1542 = vmatpush1.msra.mxu0 0.0
        %1543 = vmatprep.subr.mxu0 0.0
        %1544 = vmatpush1.msra.mxu0 0.0
        %1545 = vmatprep.subr.mxu0 0.0
        %1546 = vmatpush1.msra.mxu0 0.0
        %1547 = vmatprep.subr.mxu0 0.0
        %1548 = vmatpush1.msra.mxu0 0.0
        %1549 = vmatprep.subr.mxu0 0.0
        %1550 = vmatpush1.msra.mxu0 0.0
        %1551 = vmatprep.subr.mxu0 0.0
        %1552 = vmatpush1.msra.mxu0 0.0
        %1553 = vmatprep.subr.mxu0 0.0
        %1554 = vmatpush1.msra.mxu0 0.0
        %1555 = vmatprep.subr.mxu0 0.0
        %1556 = vmatpush1.msra.mxu0 0.0
        %1557 = vmatprep.subr.mxu0 0.0
        %1558 = vmatpush1.msra.mxu0 0.0
        %1559 = vmatprep.subr.mxu0 0.0
        %1560 = vmatpush1.msra.mxu0 0.0
        %1561 = vmatprep.subr.mxu0 0.0
        %1562 = vmatpush1.msra.mxu0 %v1526
        %1563 = vmatprep.subr.mxu0 0.0
        %1564 = vmatpush2.msra.mxu0 0.0
        %1565 = vmatprep.subr.mxu0 0.0
        %1566 = vmatpush2.msra.mxu0 0.0
        %1567 = vmatprep.subr.mxu0 0.0
        %1568 = vmatpush2.msra.mxu0 0.0
        %1569 = vmatprep.subr.mxu0 0.0
        %1570 = vmatpush2.msra.mxu0 0.0
        %1571 = vmatprep.subr.mxu0 0.0
        %1572 = vmatpush2.msra.mxu0 0.0
        %1573 = vmatprep.subr.mxu0 0.0
        %1574 = vmatpush2.msra.mxu0 0.0
        %1575 = vmatprep.subr.mxu0 0.0
        %1576 = vmatpush2.msra.mxu0 0.0
        %1577 = vmatprep.subr.mxu0 0.0
        %1578 = vmatpush2.msra.mxu0 0.0
        %1579 = vmatprep.subr.mxu0 0.0
        %1580 = vmatpush2.msra.mxu0 0.0
        %1581 = vmatprep.subr.mxu0 0.0
        %1582 = vmatpush2.msra.mxu0 0.0
        %1583 = vmatprep.subr.mxu0 0.0
        %1584 = vmatpush2.msra.mxu0 0.0
        %1585 = vmatprep.subr.mxu0 0.0
        %1586 = vmatpush2.msra.mxu0 0.0
        %1587 = vmatprep.subr.mxu0 0.0
        %1588 = vmatpush2.msra.mxu0 0.0
        %1589 = vmatprep.subr.mxu0 0.0
        %1590 = vmatpush2.msra.mxu0 0.0
        %1591 = vmatprep.subr.mxu0 0.0
        %1592 = vmatpush2.msra.mxu0 0.0
        %1593 = vmatprep.subr.mxu0 0.0
        %1594 = vmatpush2.msra.mxu0 0.0
        %1595 = vmatprep.mubr.f32.mxu0 0.0
        %1596 = vmatmul.mubr.f32.gmra.mxu0 %v1529
        %v1597 = vpop.f32.mrf.mxu0
        %v1598 = vadd.f32 0.0, %v1597
        %v1599 = vpop.f32.mrf.mxu0
        %1600 = vdwg.mxu0
        %1601 = vrot.lane.b32.xlu0 %v592, 64
        %v1602 = vpop.permute.xlu0 %1601
        %v1605 = vsel %vm1208, %v1293, 0
        %1607 = vmatprep.subr.mxu0 0.0
        %1608 = vmatpush1.msra.mxu0 0.0
        %1609 = vmatprep.subr.mxu0 0.0
        %1610 = vmatpush1.msra.mxu0 0.0
        %1611 = vmatprep.subr.mxu0 0.0
        %1612 = vmatpush1.msra.mxu0 0.0
        %1613 = vmatprep.subr.mxu0 0.0
        %1614 = vmatpush1.msra.mxu0 0.0
        %1615 = vmatprep.subr.mxu0 0.0
        %1616 = vmatpush1.msra.mxu0 0.0
        %1617 = vmatprep.subr.mxu0 0.0
        %1618 = vmatpush1.msra.mxu0 0.0
        %1619 = vmatprep.subr.mxu0 0.0
        %1620 = vmatpush1.msra.mxu0 0.0
        %1621 = vmatprep.subr.mxu0 0.0
        %1622 = vmatpush1.msra.mxu0 0.0
        %1623 = vmatprep.subr.mxu0 0.0
        %1624 = vmatpush1.msra.mxu0 0.0
        %1625 = vmatprep.subr.mxu0 0.0
        %1626 = vmatpush1.msra.mxu0 0.0
        %1627 = vmatprep.subr.mxu0 0.0
        %1628 = vmatpush1.msra.mxu0 0.0
        %1629 = vmatprep.subr.mxu0 0.0
        %1630 = vmatpush1.msra.mxu0 0.0
        %1631 = vmatprep.subr.mxu0 0.0
        %1632 = vmatpush1.msra.mxu0 0.0
        %1633 = vmatprep.subr.mxu0 0.0
        %1634 = vmatpush1.msra.mxu0 0.0
        %1635 = vmatprep.subr.mxu0 0.0
        %1636 = vmatpush1.msra.mxu0 0.0
        %1637 = vmatprep.subr.mxu0 0.0
        %1638 = vmatpush1.msra.mxu0 %v1602
        %1639 = vmatprep.subr.mxu0 0.0
        %1640 = vmatpush2.msra.mxu0 0.0
        %1641 = vmatprep.subr.mxu0 0.0
        %1642 = vmatpush2.msra.mxu0 0.0
        %1643 = vmatprep.subr.mxu0 0.0
        %1644 = vmatpush2.msra.mxu0 0.0
        %1645 = vmatprep.subr.mxu0 0.0
        %1646 = vmatpush2.msra.mxu0 0.0
        %1647 = vmatprep.subr.mxu0 0.0
        %1648 = vmatpush2.msra.mxu0 0.0
        %1649 = vmatprep.subr.mxu0 0.0
        %1650 = vmatpush2.msra.mxu0 0.0
        %1651 = vmatprep.subr.mxu0 0.0
        %1652 = vmatpush2.msra.mxu0 0.0
        %1653 = vmatprep.subr.mxu0 0.0
        %1654 = vmatpush2.msra.mxu0 0.0
        %1655 = vmatprep.subr.mxu0 0.0
        %1656 = vmatpush2.msra.mxu0 0.0
        %1657 = vmatprep.subr.mxu0 0.0
        %1658 = vmatpush2.msra.mxu0 0.0
        %1659 = vmatprep.subr.mxu0 0.0
        %1660 = vmatpush2.msra.mxu0 0.0
        %1661 = vmatprep.subr.mxu0 0.0
        %1662 = vmatpush2.msra.mxu0 0.0
        %1663 = vmatprep.subr.mxu0 0.0
        %1664 = vmatpush2.msra.mxu0 0.0
        %1665 = vmatprep.subr.mxu0 0.0
        %1666 = vmatpush2.msra.mxu0 0.0
        %1667 = vmatprep.subr.mxu0 0.0
        %1668 = vmatpush2.msra.mxu0 0.0
        %1669 = vmatprep.subr.mxu0 0.0
        %1670 = vmatpush2.msra.mxu0 0.0
        %1671 = vmatprep.mubr.f32.mxu0 0.0
        %1672 = vmatmul.mubr.f32.gmra.mxu0 %v1605
        %v1673 = vpop.f32.mrf.mxu0
        %v1674 = vadd.f32 0.0, %v1673
        %v1675 = vpop.f32.mrf.mxu0
        %1676 = vdwg.mxu0
        %1677 = vrot.lane.b32.xlu0 %v594, 64
        %v1678 = vpop.permute.xlu0 %1677
        %v1681 = vsel %vm1208, %v1294, 0
        %1683 = vmatprep.subr.mxu0 0.0
        %1684 = vmatpush1.msra.mxu0 0.0
        %1685 = vmatprep.subr.mxu0 0.0
        %1686 = vmatpush1.msra.mxu0 0.0
        %1687 = vmatprep.subr.mxu0 0.0
        %1688 = vmatpush1.msra.mxu0 0.0
        %1689 = vmatprep.subr.mxu0 0.0
        %1690 = vmatpush1.msra.mxu0 0.0
        %1691 = vmatprep.subr.mxu0 0.0
        %1692 = vmatpush1.msra.mxu0 0.0
        %1693 = vmatprep.subr.mxu0 0.0
        %1694 = vmatpush1.msra.mxu0 0.0
        %1695 = vmatprep.subr.mxu0 0.0
        %1696 = vmatpush1.msra.mxu0 0.0
        %1697 = vmatprep.subr.mxu0 0.0
        %1698 = vmatpush1.msra.mxu0 0.0
        %1699 = vmatprep.subr.mxu0 0.0
        %1700 = vmatpush1.msra.mxu0 0.0
        %1701 = vmatprep.subr.mxu0 0.0
        %1702 = vmatpush1.msra.mxu0 0.0
        %1703 = vmatprep.subr.mxu0 0.0
        %1704 = vmatpush1.msra.mxu0 0.0
        %1705 = vmatprep.subr.mxu0 0.0
        %1706 = vmatpush1.msra.mxu0 0.0
        %1707 = vmatprep.subr.mxu0 0.0
        %1708 = vmatpush1.msra.mxu0 0.0
        %1709 = vmatprep.subr.mxu0 0.0
        %1710 = vmatpush1.msra.mxu0 0.0
        %1711 = vmatprep.subr.mxu0 0.0
        %1712 = vmatpush1.msra.mxu0 0.0
        %1713 = vmatprep.subr.mxu0 0.0
        %1714 = vmatpush1.msra.mxu0 %v1678
        %1715 = vmatprep.subr.mxu0 0.0
        %1716 = vmatpush2.msra.mxu0 0.0
        %1717 = vmatprep.subr.mxu0 0.0
        %1718 = vmatpush2.msra.mxu0 0.0
        %1719 = vmatprep.subr.mxu0 0.0
        %1720 = vmatpush2.msra.mxu0 0.0
        %1721 = vmatprep.subr.mxu0 0.0
        %1722 = vmatpush2.msra.mxu0 0.0
        %1723 = vmatprep.subr.mxu0 0.0
        %1724 = vmatpush2.msra.mxu0 0.0
        %1725 = vmatprep.subr.mxu0 0.0
        %1726 = vmatpush2.msra.mxu0 0.0
        %1727 = vmatprep.subr.mxu0 0.0
        %1728 = vmatpush2.msra.mxu0 0.0
        %1729 = vmatprep.subr.mxu0 0.0
        %1730 = vmatpush2.msra.mxu0 0.0
        %1731 = vmatprep.subr.mxu0 0.0
        %1732 = vmatpush2.msra.mxu0 0.0
        %1733 = vmatprep.subr.mxu0 0.0
        %1734 = vmatpush2.msra.mxu0 0.0
        %1735 = vmatprep.subr.mxu0 0.0
        %1736 = vmatpush2.msra.mxu0 0.0
        %1737 = vmatprep.subr.mxu0 0.0
        %1738 = vmatpush2.msra.mxu0 0.0
        %1739 = vmatprep.subr.mxu0 0.0
        %1740 = vmatpush2.msra.mxu0 0.0
        %1741 = vmatprep.subr.mxu0 0.0
        %1742 = vmatpush2.msra.mxu0 0.0
        %1743 = vmatprep.subr.mxu0 0.0
        %1744 = vmatpush2.msra.mxu0 0.0
        %1745 = vmatprep.subr.mxu0 0.0
        %1746 = vmatpush2.msra.mxu0 0.0
        %1747 = vmatprep.mubr.f32.mxu0 0.0
        %1748 = vmatmul.mubr.f32.gmra.mxu0 %v1681
        %v1749 = vpop.f32.mrf.mxu0
        %v1750 = vadd.f32 0.0, %v1749
        %v1751 = vpop.f32.mrf.mxu0
        %1752 = vdwg.mxu0
        %1753 = vrot.lane.b32.xlu0 %v596, 64
        %v1754 = vpop.permute.xlu0 %1753
        %v1757 = vsel %vm1208, %v1295, 0
        %1759 = vmatprep.subr.mxu0 0.0
        %1760 = vmatpush1.msra.mxu0 0.0
        %1761 = vmatprep.subr.mxu0 0.0
        %1762 = vmatpush1.msra.mxu0 0.0
        %1763 = vmatprep.subr.mxu0 0.0
        %1764 = vmatpush1.msra.mxu0 0.0
        %1765 = vmatprep.subr.mxu0 0.0
        %1766 = vmatpush1.msra.mxu0 0.0
        %1767 = vmatprep.subr.mxu0 0.0
        %1768 = vmatpush1.msra.mxu0 0.0
        %1769 = vmatprep.subr.mxu0 0.0
        %1770 = vmatpush1.msra.mxu0 0.0
        %1771 = vmatprep.subr.mxu0 0.0
        %1772 = vmatpush1.msra.mxu0 0.0
        %1773 = vmatprep.subr.mxu0 0.0
        %1774 = vmatpush1.msra.mxu0 0.0
        %1775 = vmatprep.subr.mxu0 0.0
        %1776 = vmatpush1.msra.mxu0 0.0
        %1777 = vmatprep.subr.mxu0 0.0
        %1778 = vmatpush1.msra.mxu0 0.0
        %1779 = vmatprep.subr.mxu0 0.0
        %1780 = vmatpush1.msra.mxu0 0.0
        %1781 = vmatprep.subr.mxu0 0.0
        %1782 = vmatpush1.msra.mxu0 0.0
        %1783 = vmatprep.subr.mxu0 0.0
        %1784 = vmatpush1.msra.mxu0 0.0
        %1785 = vmatprep.subr.mxu0 0.0
        %1786 = vmatpush1.msra.mxu0 0.0
        %1787 = vmatprep.subr.mxu0 0.0
        %1788 = vmatpush1.msra.mxu0 0.0
        %1789 = vmatprep.subr.mxu0 0.0
        %1790 = vmatpush1.msra.mxu0 %v1754
        %1791 = vmatprep.subr.mxu0 0.0
        %1792 = vmatpush2.msra.mxu0 0.0
        %1793 = vmatprep.subr.mxu0 0.0
        %1794 = vmatpush2.msra.mxu0 0.0
        %1795 = vmatprep.subr.mxu0 0.0
        %1796 = vmatpush2.msra.mxu0 0.0
        %1797 = vmatprep.subr.mxu0 0.0
        %1798 = vmatpush2.msra.mxu0 0.0
        %1799 = vmatprep.subr.mxu0 0.0
        %1800 = vmatpush2.msra.mxu0 0.0
        %1801 = vmatprep.subr.mxu0 0.0
        %1802 = vmatpush2.msra.mxu0 0.0
        %1803 = vmatprep.subr.mxu0 0.0
        %1804 = vmatpush2.msra.mxu0 0.0
        %1805 = vmatprep.subr.mxu0 0.0
        %1806 = vmatpush2.msra.mxu0 0.0
        %1807 = vmatprep.subr.mxu0 0.0
        %1808 = vmatpush2.msra.mxu0 0.0
        %1809 = vmatprep.subr.mxu0 0.0
        %1810 = vmatpush2.msra.mxu0 0.0
        %1811 = vmatprep.subr.mxu0 0.0
        %1812 = vmatpush2.msra.mxu0 0.0
        %1813 = vmatprep.subr.mxu0 0.0
        %1814 = vmatpush2.msra.mxu0 0.0
        %1815 = vmatprep.subr.mxu0 0.0
        %1816 = vmatpush2.msra.mxu0 0.0
        %1817 = vmatprep.subr.mxu0 0.0
        %1818 = vmatpush2.msra.mxu0 0.0
        %1819 = vmatprep.subr.mxu0 0.0
        %1820 = vmatpush2.msra.mxu0 0.0
        %1821 = vmatprep.subr.mxu0 0.0
        %1822 = vmatpush2.msra.mxu0 0.0
        %1823 = vmatprep.mubr.f32.mxu0 0.0
        %1824 = vmatmul.mubr.f32.gmra.mxu0 %v1757
        %v1825 = vpop.f32.mrf.mxu0
        %v1826 = vadd.f32 0.0, %v1825
        %v1827 = vpop.f32.mrf.mxu0
        %1828 = vdwg.mxu0
        %1829 = vrot.lane.b32.xlu0 %v598, 64
        %v1830 = vpop.permute.xlu0 %1829
        %v1833 = vsel %vm1208, %v1296, 0
        %1835 = vmatprep.subr.mxu0 0.0
        %1836 = vmatpush1.msra.mxu0 0.0
        %1837 = vmatprep.subr.mxu0 0.0
        %1838 = vmatpush1.msra.mxu0 0.0
        %1839 = vmatprep.subr.mxu0 0.0
        %1840 = vmatpush1.msra.mxu0 0.0
        %1841 = vmatprep.subr.mxu0 0.0
        %1842 = vmatpush1.msra.mxu0 0.0
        %1843 = vmatprep.subr.mxu0 0.0
        %1844 = vmatpush1.msra.mxu0 0.0
        %1845 = vmatprep.subr.mxu0 0.0
        %1846 = vmatpush1.msra.mxu0 0.0
        %1847 = vmatprep.subr.mxu0 0.0
        %1848 = vmatpush1.msra.mxu0 0.0
        %1849 = vmatprep.subr.mxu0 0.0
        %1850 = vmatpush1.msra.mxu0 0.0
        %1851 = vmatprep.subr.mxu0 0.0
        %1852 = vmatpush1.msra.mxu0 0.0
        %1853 = vmatprep.subr.mxu0 0.0
        %1854 = vmatpush1.msra.mxu0 0.0
        %1855 = vmatprep.subr.mxu0 0.0
        %1856 = vmatpush1.msra.mxu0 0.0
        %1857 = vmatprep.subr.mxu0 0.0
        %1858 = vmatpush1.msra.mxu0 0.0
        %1859 = vmatprep.subr.mxu0 0.0
        %1860 = vmatpush1.msra.mxu0 0.0
        %1861 = vmatprep.subr.mxu0 0.0
        %1862 = vmatpush1.msra.mxu0 0.0
        %1863 = vmatprep.subr.mxu0 0.0
        %1864 = vmatpush1.msra.mxu0 0.0
        %1865 = vmatprep.subr.mxu0 0.0
        %1866 = vmatpush1.msra.mxu0 %v1830
        %1867 = vmatprep.subr.mxu0 0.0
        %1868 = vmatpush2.msra.mxu0 0.0
        %1869 = vmatprep.subr.mxu0 0.0
        %1870 = vmatpush2.msra.mxu0 0.0
        %1871 = vmatprep.subr.mxu0 0.0
        %1872 = vmatpush2.msra.mxu0 0.0
        %1873 = vmatprep.subr.mxu0 0.0
        %1874 = vmatpush2.msra.mxu0 0.0
        %1875 = vmatprep.subr.mxu0 0.0
        %1876 = vmatpush2.msra.mxu0 0.0
        %1877 = vmatprep.subr.mxu0 0.0
        %1878 = vmatpush2.msra.mxu0 0.0
        %1879 = vmatprep.subr.mxu0 0.0
        %1880 = vmatpush2.msra.mxu0 0.0
        %1881 = vmatprep.subr.mxu0 0.0
        %1882 = vmatpush2.msra.mxu0 0.0
        %1883 = vmatprep.subr.mxu0 0.0
        %1884 = vmatpush2.msra.mxu0 0.0
        %1885 = vmatprep.subr.mxu0 0.0
        %1886 = vmatpush2.msra.mxu0 0.0
        %1887 = vmatprep.subr.mxu0 0.0
        %1888 = vmatpush2.msra.mxu0 0.0
        %1889 = vmatprep.subr.mxu0 0.0
        %1890 = vmatpush2.msra.mxu0 0.0
        %1891 = vmatprep.subr.mxu0 0.0
        %1892 = vmatpush2.msra.mxu0 0.0
        %1893 = vmatprep.subr.mxu0 0.0
        %1894 = vmatpush2.msra.mxu0 0.0
        %1895 = vmatprep.subr.mxu0 0.0
        %1896 = vmatpush2.msra.mxu0 0.0
        %1897 = vmatprep.subr.mxu0 0.0
        %1898 = vmatpush2.msra.mxu0 0.0
        %1899 = vmatprep.mubr.f32.mxu0 0.0
        %1900 = vmatmul.mubr.f32.gmra.mxu0 %v1833
        %v1901 = vpop.f32.mrf.mxu0
        %v1902 = vadd.f32 0.0, %v1901
        %v1903 = vpop.f32.mrf.mxu0
        %1904 = vdwg.mxu0
        %1906 = vrot.lane.b32.xlu0 %v1446, 4
        %v1907 = vpop.permute.xlu0 %1906
        %1910 = vrot.lane.b32.xlu0 %v1522, 8
        %v1911 = vpop.permute.xlu0 %1910
        %1914 = vrot.lane.b32.xlu0 %v1598, 12
        %v1915 = vpop.permute.xlu0 %1914
        %1918 = vrot.lane.b32.xlu0 %v1674, 16
        %v1919 = vpop.permute.xlu0 %1918
        %1922 = vrot.lane.b32.xlu0 %v1750, 20
        %v1923 = vpop.permute.xlu0 %1922
        %1926 = vrot.lane.b32.xlu0 %v1826, 24
        %v1927 = vpop.permute.xlu0 %1926
        %1930 = vrot.lane.b32.xlu0 %v1902, 28
        %v1931 = vpop.permute.xlu0 %1930
        %v1933 = vsel %vm601, %v1370, %v1907
        %v1934 = vsel %vm1208, %v1933, %v1911
        %vm1935 = vcmask 97280
        %v1936 = vsel %vm1935, %v1934, %v1915
        %vm1937 = vcmask 130048
        %v1938 = vsel %vm1937, %v1936, %v1919
        %vm1939 = vcmask 162816
        %v1940 = vsel %vm1939, %v1938, %v1923
        %vm1941 = vcmask 195584
        %v1942 = vsel %vm1941, %v1940, %v1927
        %vm1943 = vcmask 228352
        %v1944 = vsel %vm1943, %v1942, %v1931
        %v1945 = vpack.c.bf16 %v1944, %v1944
        %v1946 = vld [vmem:[%s3] sm:$0xf]
        %v1947 = vld [vmem:[%s3 + $0x4] sm:$0xf]
        %v1948 = vld [vmem:[%s3 + $0x8] sm:$0xf]
        %v1949 = vld [vmem:[%s3 + $0xc] sm:$0xf]
        %v1950 = vld [vmem:[#allocation5] sm:$0x1]
        %v1952 = vlaneseq
        %v1953 = vshrl.u32 %v1952, 7
        %v1954 = vsub.s32 0, %v1953
        %v1955 = vrot.slane %v1950, %v1954
        %v1961 = vunpack.c.l.b16 %v1946
        %v1962 = vunpack.c.l.b16 %v1947
        %v1963 = vunpack.c.l.b16 %v1948
        %v1964 = vunpack.c.l.b16 %v1949
        %v1965 = vpack.c.b16 %v1962, %v1961
        %v1966 = vpack.c.b16 %v1964, %v1963
        %v1970 = vsel %vm540, %v1945, 0
        %1972 = vmatprep.subr.bf16.mxu0 0
        %1973 = vmatpush1.bf16.msra.mxu0 0
        %1974 = vmatprep.subr.bf16.mxu0 0
        %1975 = vmatpush1.bf16.msra.mxu0 0
        %1976 = vmatprep.subr.bf16.mxu0 0
        %1977 = vmatpush1.bf16.msra.mxu0 0
        %1978 = vmatprep.subr.bf16.mxu0 0
        %1979 = vmatpush1.bf16.msra.mxu0 0
        %1980 = vmatprep.subr.bf16.mxu0 0
        %1981 = vmatpush1.bf16.msra.mxu0 0
        %1982 = vmatprep.subr.bf16.mxu0 0
        %1983 = vmatpush1.bf16.msra.mxu0 0
        %1984 = vmatprep.subr.bf16.mxu0 0
        %1985 = vmatpush1.bf16.msra.mxu0 %v1966
        %1986 = vmatprep.subr.bf16.mxu0 0
        %1987 = vmatpush1.bf16.msra.mxu0 %v1965
        %1988 = vmatprep.subr.bf16.mxu0 0
        %1989 = vmatpush2.bf16.msra.mxu0 0
        %1990 = vmatprep.subr.bf16.mxu0 0
        %1991 = vmatpush2.bf16.msra.mxu0 0
        %1992 = vmatprep.subr.bf16.mxu0 0
        %1993 = vmatpush2.bf16.msra.mxu0 0
        %1994 = vmatprep.subr.bf16.mxu0 0
        %1995 = vmatpush2.bf16.msra.mxu0 0
        %1996 = vmatprep.subr.bf16.mxu0 0
        %1997 = vmatpush2.bf16.msra.mxu0 0
        %1998 = vmatprep.subr.bf16.mxu0 0
        %1999 = vmatpush2.bf16.msra.mxu0 0
        %2000 = vmatprep.subr.bf16.mxu0 0
        %2001 = vmatpush2.bf16.msra.mxu0 0
        %2002 = vmatprep.subr.bf16.mxu0 0
        %2003 = vmatpush2.bf16.msra.mxu0 0
        %2004 = vmatprep.mubr.bf16.mxu0 0
        %2005 = vmatmul.mubr.bf16.gmra.mxu0 %v1970
        %v2006 = vpop.f32.mrf.mxu0
        %v2007 = vadd.f32 %v1955, %v2006
        %v2008 = vpop.f32.mrf.mxu0
        %v2009 = vpop.f32.mrf.mxu0
        %v2010 = vpop.f32.mrf.mxu0
        %2011 = vdwg.mxu0
        %v2012 = vadd.f32 %v2007, %v515
        %v2013 = vsel %vm540, %v2012, 0.0
        %2014 = vadd.xlane.f32.xlu0 %v2013
        %v2015 = vpop.xlane.xlu0 %2014
        %v2016 = vmul.f32 %v2015, 0.03125
        %v2017 = vmul.f32 %v2012, %v2012
        %v2018 = vsel %vm540, %v2017, 0.0
        %2019 = vadd.xlane.f32.xlu0 %v2018
        %v2020 = vpop.xlane.xlu0 %2019
        %v2021 = vmul.f32 %v2020, 0.03125
        %v2022 = vsub.f32 %v2012, %v2016
        %v2023 = vmul.f32 %v2016, %v2016
        %v2024 = vsub.f32 %v2021, %v2023
        %v2025 = vadd.f32 %v2024, 1e-05
        %v2026 = vrsqrt.pop %v2025
        %v2027 = vmul.f32 %v2022, %v2026
        %v2028 = vld [vmem:[#allocation7] sm:$0x1]
        %v2030 = vlaneseq
        %v2031 = vshrl.u32 %v2030, 7
        %v2032 = vsub.s32 0, %v2031
        %v2033 = vrot.slane %v2028, %v2032
        %v2035 = vmul.f32 %v2027, %v2033
        %v2036 = vld [vmem:[#allocation8] sm:$0x1]
        %v2038 = vlaneseq
        %v2039 = vshrl.u32 %v2038, 7
        %v2040 = vsub.s32 0, %v2039
        %v2041 = vrot.slane %v2036, %v2040
        %v2043 = vadd.f32 %v2035, %v2041
        %v2044 = vpack.c.bf16 %v2043, %v2043
        %v2045 = vld [vmem:[#allocation10] sm:$0xf]
        %v2046 = vld [vmem:[#allocation10 + $0x4] sm:$0xf]
        %v2047 = vld [vmem:[#allocation10 + $0x8] sm:$0xf]
        %v2048 = vld [vmem:[#allocation10 + $0xc] sm:$0xf]
        %v2049 = vld [vmem:[#allocation11] sm:$0x1]
        %v2051 = vlaneseq
        %v2052 = vshrl.u32 %v2051, 7
        %v2053 = vsub.s32 0, %v2052
        %v2054 = vrot.slane %v2049, %v2053
        %v2060 = vunpack.c.l.b16 %v2045
        %v2061 = vunpack.c.l.b16 %v2046
        %v2062 = vunpack.c.l.b16 %v2047
        %v2063 = vunpack.c.l.b16 %v2048
        %v2064 = vpack.c.b16 %v2061, %v2060
        %v2065 = vpack.c.b16 %v2063, %v2062
        %v2069 = vsel %vm540, %v2044, 0
        %2071 = vmatprep.subr.bf16.mxu0 0
        %2072 = vmatpush1.bf16.msra.mxu0 0
        %2073 = vmatprep.subr.bf16.mxu0 0
        %2074 = vmatpush1.bf16.msra.mxu0 0
        %2075 = vmatprep.subr.bf16.mxu0 0
        %2076 = vmatpush1.bf16.msra.mxu0 0
        %2077 = vmatprep.subr.bf16.mxu0 0
        %2078 = vmatpush1.bf16.msra.mxu0 0
        %2079 = vmatprep.subr.bf16.mxu0 0
        %2080 = vmatpush1.bf16.msra.mxu0 0
        %2081 = vmatprep.subr.bf16.mxu0 0
        %2082 = vmatpush1.bf16.msra.mxu0 0
        %2083 = vmatprep.subr.bf16.mxu0 0
        %2084 = vmatpush1.bf16.msra.mxu0 %v2065
        %2085 = vmatprep.subr.bf16.mxu0 0
        %2086 = vmatpush1.bf16.msra.mxu0 %v2064
        %2087 = vmatprep.subr.bf16.mxu0 0
        %2088 = vmatpush2.bf16.msra.mxu0 0
        %2089 = vmatprep.subr.bf16.mxu0 0
        %2090 = vmatpush2.bf16.msra.mxu0 0
        %2091 = vmatprep.subr.bf16.mxu0 0
        %2092 = vmatpush2.bf16.msra.mxu0 0
        %2093 = vmatprep.subr.bf16.mxu0 0
        %2094 = vmatpush2.bf16.msra.mxu0 0
        %2095 = vmatprep.subr.bf16.mxu0 0
        %2096 = vmatpush2.bf16.msra.mxu0 0
        %2097 = vmatprep.subr.bf16.mxu0 0
        %2098 = vmatpush2.bf16.msra.mxu0 0
        %2099 = vmatprep.subr.bf16.mxu0 0
        %2100 = vmatpush2.bf16.msra.mxu0 0
        %2101 = vmatprep.subr.bf16.mxu0 0
        %2102 = vmatpush2.bf16.msra.mxu0 0
        %2103 = vmatprep.mubr.bf16.mxu0 0
        %2104 = vmatmul.mubr.bf16.gmra.mxu0 %v2069
        %v2105 = vpop.f32.mrf.mxu0
        %v2106 = vadd.f32 %v2054, %v2105
        %v2107 = vpop.f32.mrf.mxu0
        %v2108 = vpop.f32.mrf.mxu0
        %v2109 = vpop.f32.mrf.mxu0
        %2110 = vdwg.mxu0
        %v2111 = vmax.f32 %v2106, 0.0
        %v2112 = vpack.c.bf16 %v2111, %v2111
        %v2113 = vld [vmem:[%s9] sm:$0xf]
        %v2114 = vld [vmem:[%s9 + $0x4] sm:$0xf]
        %v2115 = vld [vmem:[%s9 + $0x8] sm:$0xf]
        %v2116 = vld [vmem:[%s9 + $0xc] sm:$0xf]
        %v2117 = vld [vmem:[%s9 + $0x10] sm:$0xf]
        %v2118 = vld [vmem:[%s9 + $0x14] sm:$0xf]
        %v2119 = vld [vmem:[%s9 + $0x18] sm:$0xf]
        %v2120 = vld [vmem:[%s9 + $0x1c] sm:$0xf]
        %v2121 = vld [vmem:[%s10] sm:$0x1]
        %v2123 = vlaneseq
        %v2124 = vshrl.u32 %v2123, 7
        %v2125 = vsub.s32 0, %v2124
        %v2126 = vrot.slane %v2121, %v2125
        %v2136 = vunpack.c.l.b16 %v2113
        %v2137 = vunpack.c.l.b16 %v2114
        %v2138 = vunpack.c.l.b16 %v2115
        %v2139 = vunpack.c.l.b16 %v2116
        %v2140 = vunpack.c.l.b16 %v2117
        %v2141 = vunpack.c.l.b16 %v2118
        %v2142 = vunpack.c.l.b16 %v2119
        %v2143 = vunpack.c.l.b16 %v2120
        %v2144 = vpack.c.b16 %v2137, %v2136
        %v2145 = vpack.c.b16 %v2139, %v2138
        %v2146 = vpack.c.b16 %v2141, %v2140
        %v2147 = vpack.c.b16 %v2143, %v2142
        %vm2152 = vcmask 523264
        %v2154 = vsel %vm2152, %v2112, 0
        %2156 = vmatprep.subr.bf16.mxu0 0
        %2157 = vmatpush1.bf16.msra.mxu0 0
        %2158 = vmatprep.subr.bf16.mxu0 0
        %2159 = vmatpush1.bf16.msra.mxu0 0
        %2160 = vmatprep.subr.bf16.mxu0 0
        %2161 = vmatpush1.bf16.msra.mxu0 0
        %2162 = vmatprep.subr.bf16.mxu0 0
        %2163 = vmatpush1.bf16.msra.mxu0 0
        %2164 = vmatprep.subr.bf16.mxu0 0
        %2165 = vmatpush1.bf16.msra.mxu0 %v2147
        %2166 = vmatprep.subr.bf16.mxu0 0
        %2167 = vmatpush1.bf16.msra.mxu0 %v2146
        %2168 = vmatprep.subr.bf16.mxu0 0
        %2169 = vmatpush1.bf16.msra.mxu0 %v2145
        %2170 = vmatprep.subr.bf16.mxu0 0
        %2171 = vmatpush1.bf16.msra.mxu0 %v2144
        %2172 = vmatprep.subr.bf16.mxu0 0
        %2173 = vmatpush2.bf16.msra.mxu0 0
        %2174 = vmatprep.subr.bf16.mxu0 0
        %2175 = vmatpush2.bf16.msra.mxu0 0
        %2176 = vmatprep.subr.bf16.mxu0 0
        %2177 = vmatpush2.bf16.msra.mxu0 0
        %2178 = vmatprep.subr.bf16.mxu0 0
        %2179 = vmatpush2.bf16.msra.mxu0 0
        %2180 = vmatprep.subr.bf16.mxu0 0
        %2181 = vmatpush2.bf16.msra.mxu0 0
        %2182 = vmatprep.subr.bf16.mxu0 0
        %2183 = vmatpush2.bf16.msra.mxu0 0
        %2184 = vmatprep.subr.bf16.mxu0 0
        %2185 = vmatpush2.bf16.msra.mxu0 0
        %2186 = vmatprep.subr.bf16.mxu0 0
        %2187 = vmatpush2.bf16.msra.mxu0 0
        %2188 = vmatprep.mubr.bf16.mxu0 0
        %2189 = vmatmul.mubr.bf16.gmra.mxu0 %v2154
        %v2190 = vpop.f32.mrf.mxu0
        %v2191 = vadd.f32 %v2126, %v2190
        %v2192 = vpop.f32.mrf.mxu0
        %v2193 = vpop.f32.mrf.mxu0
        %v2194 = vpop.f32.mrf.mxu0
        %2195 = vdwg.mxu0
        %v2196 = vadd.f32 %v2191, %v2043
        %v2197 = vsel %vm540, %v2196, 0.0
        %2198 = vadd.xlane.f32.xlu0 %v2197
        %v2199 = vpop.xlane.xlu0 %2198
        %v2200 = vmul.f32 %v2199, 0.03125
        %v2201 = vmul.f32 %v2196, %v2196
        %v2202 = vsel %vm540, %v2201, 0.0
        %2203 = vadd.xlane.f32.xlu0 %v2202
        %v2204 = vpop.xlane.xlu0 %2203
        %v2205 = vmul.f32 %v2204, 0.03125
        %v2206 = vsub.f32 %v2196, %v2200
        %v2207 = vmul.f32 %v2200, %v2200
        %v2208 = vsub.f32 %v2205, %v2207
        %v2209 = vadd.f32 %v2208, 1e-05
        %v2210 = vrsqrt.pop %v2209
        %v2211 = vmul.f32 %v2206, %v2210
        %v2212 = vld [vmem:[%s11] sm:$0x1]
        %v2214 = vlaneseq
        %v2215 = vshrl.u32 %v2214, 7
        %v2216 = vsub.s32 0, %v2215
        %v2217 = vrot.slane %v2212, %v2216
        %v2219 = vmul.f32 %v2211, %v2217
        %v2220 = vld [vmem:[%s12] sm:$0x1]
        %v2222 = vlaneseq
        %v2223 = vshrl.u32 %v2222, 7
        %v2224 = vsub.s32 0, %v2223
        %v2225 = vrot.slane %v2220, %v2224
        %v2227 = vadd.f32 %v2219, %v2225
        %2228 = vst.msk [vmem:[%s509] sm:$0xff] %vm540, %v2227
        %s2229 = sand.u32 %s317, 1
        %s2230 = scalar_lea.sflag [#allocation4], %s2229
        %s2231 = sand.u32 %s317, 1
        %s2232 = smul.addr %s2231, 8
        %s2233 = scalar_lea.vmem [#allocation13], %s2232
        // Predicated region
        $region97: #{tpu_custom_call.1} parent=71 // pred_check
          %p2234 = pneg %p327
        $region98: #{tpu_custom_call.1} parent=71 // pred_check_branch
          %2236 = sbr.rel (%p2234) target = $region100
        $region99: #{tpu_custom_call.1} parent=71 // pred_region
          %s2238 = ssub.s32 128, 128
          %2239 = vsyncadd %s2230, %s2238
          %s2240 = smul.addr %s31, 128
          %s2241 = scalar_lea.hbm %s13, %s2240
          %s2243 = sshll.u32 %s2233, 4
          %s2244 = int_to_ptr.vmem [resolvable:$true] %s2243
          %2246 = dma.vmem_to_hbm [thread:$0]  %s2244, 128, %s2241, %s2230
        $region100: #{tpu_custom_call.1} parent=71 // pred_fallthru
          _
      $region72: #{tpu_custom_call.1} parent=5 // pred_fallthru
        _
      %p2247 = scmp.le.s32.totalorder 2, %s26
      // Predicated region
      $region101: #{tpu_custom_call.1} parent=5 // pred_check
        %p2248 = pneg %p2247
      $region102: #{tpu_custom_call.1} parent=5 // pred_check_branch
        %2250 = sbr.rel (%p2248) target = $region104
      $region103: #{tpu_custom_call.1} parent=5 // pred_region
        %s2251 = ssub.s32 %s26, 2
        // Predicated region
        $region105: #{tpu_custom_call.1} parent=103 // pred_check
          %p2252 = pneg %p333
        $region106: #{tpu_custom_call.1} parent=103 // pred_check_branch
          %2254 = sbr.rel (%p2252) target = $region108
        $region107: #{tpu_custom_call.1} parent=103 // pred_region
          %s2255 = sand.u32 %s318, 1
          %s2256 = scalar_lea.sflag [#allocation4], %s2255
          %s2257 = sand.u32 %s318, 1
          %s2258 = smul.addr %s2257, 8
          %s2259 = scalar_lea.vmem [#allocation13], %s2258
          %2260 = dma.done %s2256, 128
        $region108: #{tpu_custom_call.1} parent=103 // pred_fallthru
          _
      $region104: #{tpu_custom_call.1} parent=5 // pred_fallthru
        _
    $region6: #{tpu_custom_call.1} parent=1 // loop_footer
      %s30 = sadd.s32 1, %s26
    $region7: #{tpu_custom_call.1} parent=1 // loop_footer_branch
      %25 = sbr.rel target = $region3
    $region8: #{tpu_custom_call.1} parent=1 // loop_exit
      _
    %2261 = vsyncpa [#allocation3], 1
    %s2262 = scalar_lea.sflag [#allocation3], 1
    %2263 = vsyncpa %s2262, 1
    %2264 = vsyncpa [#allocation6], 1
    %2265 = vsyncpa [#allocation9], 1
    %2266 = vsyncpa [#allocation12], 1
    %2267 = vsyncpa [#allocation4], 1
    %s2268 = scalar_lea.sflag [#allocation4], 1
    %2269 = vsyncpa %s2268, 1

</llo_original>
